<compile_context>
chip_gen: v7x
topology: tpu7x:2x2x1
jax: 0.10.0
libtpu: 0.0.40
codegen_flags: <defaults>
</compile_context>

<pallas_src>
import jax
import jax.numpy as jnp
from jax import lax
from jax.experimental import pallas as pl
from jax.experimental.pallas import tpu as pltpu


# ---------------------------------------------------------------------------
# Pallas kernel: encoder GRU + Bahdanau attention + decoder GRU + fc_out
# ---------------------------------------------------------------------------
def seq2seq_kernel(
    # inputs -----------------------------------------------------------------
    src_oh_ref,     # [S*B, Vs]      bf16 one-hot src tokens (row = s*B + b)
    tgt_oh_ref,     # [(T-1)*B, Vt]  bf16 one-hot teacher-forcing tokens
    enc_emb_ref,    # [Vs, E]  bf16
    enc_wih_ref,    # [E, 3H]  bf16   gate order [r | z | n] (PyTorch GRU)
    enc_whh_ref,    # [H, 3H]  bf16
    enc_bih_ref,    # [1, 3H]  f32
    enc_bhh_ref,    # [1, 3H]  f32
    att_wa_ref,     # [H, H]   bf16   projects decoder hidden
    att_ua_ref,     # [H, H]   bf16   projects encoder outputs
    att_va_ref,     # [1, H]   f32    score vector (used on the VPU)
    dec_emb_ref,    # [Vt, E]  bf16
    dec_wih_e_ref,  # [E, 3H]  bf16   embedding rows of decoder W_ih
    dec_wih_h_ref,  # [H, 3H]  bf16   context rows of decoder W_ih
    dec_whh_ref,    # [H, 3H]  bf16
    dec_bih_ref,    # [1, 3H]  f32
    dec_bhh_ref,    # [1, 3H]  f32
    out_wh_ref,     # [H, Vt]  bf16   hidden rows of fc_out
    out_wc_ref,     # [H, Vt]  bf16   context rows of fc_out
    out_we_ref,     # [E, Vt]  bf16   embedding rows of fc_out
    out_b_ref,      # [1, Vt]  f32
    # outputs ----------------------------------------------------------------
    out_ref,        # [(T-1)*B, Vt] f32  logits, flattened lane-dense slab
    attn_ref,       # [T-1, B, S]   f32  attention weights
    # scratch ----------------------------------------------------------------
    enc_scratch,    # [S, B, H]     encoder hidden states
    gi_enc_scratch, # [S, B, 3H]    hoisted encoder input-gate pre-activations
    gi_dec_scratch, # [T-1, B, 3H]  hoisted decoder embedding input-gate part
    dh_scratch,     # [T-1, B, H]   decoder hidden states
    ctx_scratch,    # [T-1, B, H]   attention contexts
):
    S, B, H = enc_scratch.shape
    TM1 = dh_scratch.shape[0]
    f32 = jnp.float32

    def mxu(a, w):  # bf16 MXU matmul, f32 accumulation
        return jnp.dot(a.astype(w.dtype), w, preferred_element_type=f32)

    def gru_gates(gi, gh, h):  # gi already includes b_ih, gh includes b_hh
        r = jax.nn.sigmoid(gi[:, :H] + gh[:, :H])
        z = jax.nn.sigmoid(gi[:, H:2 * H] + gh[:, H:2 * H])
        n = jnp.tanh(gi[:, 2 * H:] + r * gh[:, 2 * H:])
        return (1.0 - z) * n + z * h

    # ---- batched non-recurrent precompute: embeddings + GRU input gates ----
    x_src = mxu(src_oh_ref[...], enc_emb_ref[...])                       # [S*B, E]
    gi_enc_scratch[...] = (
        mxu(x_src, enc_wih_ref[...]) + enc_bih_ref[...]
    ).reshape(S, B, 3 * H)

    emb = mxu(tgt_oh_ref[...], dec_emb_ref[...])                         # [(T-1)*B, E]
    gi_dec_scratch[...] = (
        mxu(emb, dec_wih_e_ref[...]) + dec_bih_ref[...]
    ).reshape(TM1, B, 3 * H)

    # ---- encoder GRU recurrence (only h @ W_hh remains per step) ----
    enc_whh = enc_whh_ref[...]
    enc_bhh = enc_bhh_ref[...]

    def enc_step(s, h):
        gh = mxu(h, enc_whh) + enc_bhh
        h_new = gru_gates(gi_enc_scratch[s], gh, h)
        enc_scratch[s] = h_new
        return h_new

    h_final = lax.fori_loop(0, S, enc_step, jnp.zeros((B, H), f32))

    # ---- hoisted attention precompute, batch-major layout ----
    enc_bsh = jnp.transpose(enc_scratch[...], (1, 0, 2))                 # [B, S, H]
    enc_proj = mxu(enc_bsh.reshape(B * S, H), att_ua_ref[...]).reshape(B, S, H)
    wa = att_wa_ref[...]
    va = att_va_ref[...]                                                 # [1, H]
    dec_wih_h = dec_wih_h_ref[...]
    dec_whh = dec_whh_ref[...]
    dec_bhh = dec_bhh_ref[...]

    # ---- decoder GRU recurrence with Bahdanau attention ----
    def dec_step(i, dh):                                                 # i = t - 1
        hid_proj = mxu(dh, wa)                                           # [B, H]
        energy = jnp.tanh(enc_proj + hid_proj[:, None, :])               # [B, S, H]
        scores = jnp.sum(energy * va, axis=-1)                           # [B, S] VPU+lane-reduce
        scores = scores - jnp.max(scores, axis=-1, keepdims=True)
        w = jnp.exp(scores)
        w = w * pl.reciprocal(jnp.sum(w, axis=-1, keepdims=True), approx=True)
        ctx = jnp.sum(w[:, :, None] * enc_bsh, axis=1)                   # [B, H]

        gi = gi_dec_scratch[i] + mxu(ctx, dec_wih_h)
        gh = mxu(dh, dec_whh) + dec_bhh
        dh_new = gru_gates(gi, gh, dh)

        attn_ref[i] = w
        ctx_scratch[i] = ctx
        dh_scratch[i] = dh_new
        return dh_new

    lax.fori_loop(0, TM1, dec_step, h_final)

    # ---- deferred, batched output projection: one GEMM + one bulk store ----
    dh_all = dh_scratch[...].reshape(TM1 * B, H)
    ctx_all = ctx_scratch[...].reshape(TM1 * B, H)
    out_ref[...] = (
        mxu(dh_all, out_wh_ref[...])
        + mxu(ctx_all, out_wc_ref[...])
        + mxu(emb, out_we_ref[...])
        + out_b_ref[...]
    )


# ---------------------------------------------------------------------------
# Wrapper: one-hot encoding, weight splitting/casting, layout plumbing
# ---------------------------------------------------------------------------
def seq2seq_forward(src_ids, tgt_ids, params, src_vocab, tgt_vocab):
    B, S = src_ids.shape
    T = tgt_ids.shape[1]
    (enc_emb, enc_wih, enc_whh, enc_bih, enc_bhh,
     att_wa, att_ua, att_va,
     dec_emb, dec_wih, dec_whh, dec_bih, dec_bhh,
     out_w, out_b) = params
    E = enc_emb.shape[1]
    H = enc_whh.shape[0]
    Vt = tgt_vocab
    bf16 = jnp.bfloat16

    # one-hot tokens, time-major, flattened to [time*batch, vocab] (row = t*B + b)
    src_oh = jax.nn.one_hot(src_ids, src_vocab, dtype=bf16)
    src_oh = src_oh.transpose(1, 0, 2).reshape(S * B, src_vocab)
    tgt_oh = jax.nn.one_hot(tgt_ids[:, :-1], tgt_vocab, dtype=bf16)   # teacher-forcing inputs
    tgt_oh = tgt_oh.transpose(1, 0, 2).reshape((T - 1) * B, tgt_vocab)

    # split lane-concatenated weights so the kernel never concats along lanes
    inputs = (
        src_oh, tgt_oh,
        enc_emb.astype(bf16), enc_wih.astype(bf16), enc_whh.astype(bf16),
        enc_bih, enc_bhh,
        att_wa.astype(bf16), att_ua.astype(bf16), att_va.reshape(1, H),
        dec_emb.astype(bf16),
        dec_wih[:E].astype(bf16), dec_wih[E:].astype(bf16),
        dec_whh.astype(bf16), dec_bih, dec_bhh,
        out_w[:H].astype(bf16), out_w[H:2 * H].astype(bf16), out_w[2 * H:].astype(bf16),
        out_b,
    )

    vmem = pl.BlockSpec(memory_space=pltpu.MemorySpace.VMEM)
    logits_flat, attn_tm = pl.pallas_call(
        seq2seq_kernel,
        out_shape=(
            jax.ShapeDtypeStruct(((T - 1) * B, Vt), jnp.float32),
            jax.ShapeDtypeStruct((T - 1, B, S), jnp.float32),
        ),
        in_specs=[vmem] * len(inputs),
        out_specs=(vmem, vmem),
        scratch_shapes=[
            pltpu.VMEM((S, B, H), jnp.float32),           # encoder hidden states
            pltpu.VMEM((S, B, 3 * H), jnp.float32),       # hoisted encoder input gates
            pltpu.VMEM((T - 1, B, 3 * H), jnp.float32),   # hoisted decoder emb gates
            pltpu.VMEM((T - 1, B, H), jnp.float32),       # decoder hidden states
            pltpu.VMEM((T - 1, B, H), jnp.float32),       # attention contexts
        ],
        compiler_params=pltpu.CompilerParams(vmem_limit_bytes=64 * 1024 * 1024),
    )(*inputs)

    # t = 0 slots stay zero (matches torch.zeros init); back to batch-major.
    out_tm = logits_flat.reshape(T - 1, B, Vt)
    outputs = jnp.concatenate([jnp.zeros((1, B, Vt), jnp.float32), out_tm], axis=0)
    attns = jnp.concatenate([jnp.zeros((1, B, S), jnp.float32), attn_tm], axis=0)
    return outputs.transpose(1, 0, 2), attns.transpose(1, 0, 2)


# ---------------------------------------------------------------------------
# Deterministic parameter construction
# ---------------------------------------------------------------------------
def make_params(key, src_vocab, tgt_vocab, embed, hidden):
    ks = jax.random.split(key, 16)
    sc = 0.1
    return [
        sc * jax.random.normal(ks[0], (src_vocab, embed), jnp.float32),            # enc_emb
        sc * jax.random.normal(ks[1], (embed, 3 * hidden), jnp.float32),           # enc W_ih
        sc * jax.random.normal(ks[2], (hidden, 3 * hidden), jnp.float32),          # enc W_hh
        sc * jax.random.normal(ks[3], (1, 3 * hidden), jnp.float32),               # enc b_ih
        sc * jax.random.normal(ks[4], (1, 3 * hidden), jnp.float32),               # enc b_hh
        sc * jax.random.normal(ks[5], (hidden, hidden), jnp.float32),              # attn Wa
        sc * jax.random.normal(ks[6], (hidden, hidden), jnp.float32),              # attn Ua
        sc * jax.random.normal(ks[7], (hidden, 1), jnp.float32),                   # attn va
        sc * jax.random.normal(ks[8], (tgt_vocab, embed), jnp.float32),            # dec_emb
        sc * jax.random.normal(ks[9], (embed + hidden, 3 * hidden), jnp.float32),  # dec W_ih
        sc * jax.random.normal(ks[10], (hidden, 3 * hidden), jnp.float32),         # dec W_hh
        sc * jax.random.normal(ks[11], (1, 3 * hidden), jnp.float32),              # dec b_ih
        sc * jax.random.normal(ks[12], (1, 3 * hidden), jnp.float32),              # dec b_hh
        sc * jax.random.normal(ks[13], (2 * hidden + embed, tgt_vocab), jnp.float32),  # W_out
        sc * jax.random.normal(ks[14], (1, tgt_vocab), jnp.float32),               # b_out
    ]


if __name__ == "__main__":
    key = jax.random.PRNGKey(0)
    k_src, k_tgt, k_par = jax.random.split(key, 3)

    # small shapes consistent with the module's forward
    B, S, T = 2, 8, 6          # batch, src len, tgt len
    SRC_VOCAB, TGT_VOCAB = 20, 24
    EMBED, HIDDEN = 16, 32

    src = jax.random.randint(k_src, (B, S), 0, SRC_VOCAB, dtype=jnp.int32)
    tgt = jax.random.randint(k_tgt, (B, T), 0, TGT_VOCAB, dtype=jnp.int32)
    params = make_params(k_par, SRC_VOCAB, TGT_VOCAB, EMBED, HIDDEN)

    outputs, attentions = seq2seq_forward(src, tgt, params, SRC_VOCAB, TGT_VOCAB)
    jax.block_until_ready((outputs, attentions))

    assert outputs.shape == (B, T, TGT_VOCAB)
    assert attentions.shape == (B, T, S)
    assert bool(jnp.isfinite(outputs).all()) and bool(jnp.isfinite(attentions).all())
    # step-0 slots stay zero; attention rows (t >= 1) sum to ~1
    # (tolerance accounts for approx reciprocal + bf16 MXU inputs)
    assert float(jnp.abs(outputs[:, 0]).max()) == 0.0
    assert float(jnp.abs(attentions[:, 1:].sum(-1) - 1.0).max()) < 5e-3
    assert float(attentions.min()) >= 0.0

    print("KERNEL_OK")
</pallas_src>

<mosaic_0001>
module attributes {stable_mosaic.version = 11 : i64} {
  func.func @seq2seq_kernel(%arg0: memref<16x20xbf16, #tpu.memory_space<vmem>>, %arg1: memref<10x24xbf16, #tpu.memory_space<vmem>>, %arg2: memref<20x16xbf16, #tpu.memory_space<vmem>>, %arg3: memref<16x96xbf16, #tpu.memory_space<vmem>>, %arg4: memref<32x96xbf16, #tpu.memory_space<vmem>>, %arg5: memref<1x96xf32, #tpu.memory_space<vmem>>, %arg6: memref<1x96xf32, #tpu.memory_space<vmem>>, %arg7: memref<32x32xbf16, #tpu.memory_space<vmem>>, %arg8: memref<32x32xbf16, #tpu.memory_space<vmem>>, %arg9: memref<1x32xf32, #tpu.memory_space<vmem>>, %arg10: memref<24x16xbf16, #tpu.memory_space<vmem>>, %arg11: memref<16x96xbf16, #tpu.memory_space<vmem>>, %arg12: memref<32x96xbf16, #tpu.memory_space<vmem>>, %arg13: memref<32x96xbf16, #tpu.memory_space<vmem>>, %arg14: memref<1x96xf32, #tpu.memory_space<vmem>>, %arg15: memref<1x96xf32, #tpu.memory_space<vmem>>, %arg16: memref<32x24xbf16, #tpu.memory_space<vmem>>, %arg17: memref<32x24xbf16, #tpu.memory_space<vmem>>, %arg18: memref<16x24xbf16, #tpu.memory_space<vmem>>, %arg19: memref<1x24xf32, #tpu.memory_space<vmem>>, %arg20: memref<10x24xf32, #tpu.memory_space<vmem>>, %arg21: memref<5x2x8xf32, #tpu.memory_space<vmem>>, %arg22: memref<8x2x32xf32, #tpu.memory_space<vmem>>, %arg23: memref<8x2x96xf32, #tpu.memory_space<vmem>>, %arg24: memref<5x2x96xf32, #tpu.memory_space<vmem>>, %arg25: memref<5x2x32xf32, #tpu.memory_space<vmem>>, %arg26: memref<5x2x32xf32, #tpu.memory_space<vmem>>) attributes {dimension_semantics = [], scalar_prefetch = 0 : i64, scratch_operands = 5 : i64, tpu.core_type = #tpu.core_type<tc>} {
    %c0 = arith.constant 0 : index
    %c0_0 = arith.constant 0 : index
    %0 = vector.load %arg0[%c0, %c0_0] : memref<16x20xbf16, #tpu.memory_space<vmem>>, vector<16x20xbf16>
    %c0_1 = arith.constant 0 : index
    %c0_2 = arith.constant 0 : index
    %1 = vector.load %arg2[%c0_1, %c0_2] : memref<20x16xbf16, #tpu.memory_space<vmem>>, vector<20x16xbf16>
    %cst = arith.constant dense<0.000000e+00> : vector<16x16xf32>
    %2 = tpu.matmul %0, %1, %cst {dimension_numbers = #tpu.dot_dimension_numbers<[1], [0], [0], [1], [0, 0, 1, 1], [], []>} : vector<16x20xbf16>, vector<20x16xbf16>, vector<16x16xf32> -> vector<16x16xf32>
    %c0_3 = arith.constant 0 : index
    %c0_4 = arith.constant 0 : index
    %3 = vector.load %arg3[%c0_3, %c0_4] : memref<16x96xbf16, #tpu.memory_space<vmem>>, vector<16x96xbf16>
    %4 = arith.truncf %2 : vector<16x16xf32> to vector<16x16xbf16>
    %cst_5 = arith.constant dense<0.000000e+00> : vector<16x96xf32>
    %5 = tpu.matmul %4, %3, %cst_5 {dimension_numbers = #tpu.dot_dimension_numbers<[1], [0], [0], [1], [0, 0, 1, 1], [], []>} : vector<16x16xbf16>, vector<16x96xbf16>, vector<16x96xf32> -> vector<16x96xf32>
    %c0_6 = arith.constant 0 : index
    %c0_7 = arith.constant 0 : index
    %6 = vector.load %arg5[%c0_6, %c0_7] : memref<1x96xf32, #tpu.memory_space<vmem>>, vector<1x96xf32>
    %7 = vector.broadcast %6 : vector<1x96xf32> to vector<16x96xf32>
    %8 = arith.addf %5, %7 : vector<16x96xf32>
    %9 = vector.shape_cast %8 : vector<16x96xf32> to vector<8x2x96xf32>
    %c0_8 = arith.constant 0 : index
    %c0_9 = arith.constant 0 : index
    %c0_10 = arith.constant 0 : index
    %10 = vector.load %arg23[%c0_8, %c0_9, %c0_10] : memref<8x2x96xf32, #tpu.memory_space<vmem>>, vector<8x2x96xf32>
    tpu.vector_store %arg23[%c0_8, %c0_9, %c0_10], %9 {strides = array<i32>} : memref<8x2x96xf32, #tpu.memory_space<vmem>>, vector<8x2x96xf32>,
    %c0_11 = arith.constant 0 : index
    %c0_12 = arith.constant 0 : index
    %11 = vector.load %arg1[%c0_11, %c0_12] : memref<10x24xbf16, #tpu.memory_space<vmem>>, vector<10x24xbf16>
    %c0_13 = arith.constant 0 : index
    %c0_14 = arith.constant 0 : index
    %12 = vector.load %arg10[%c0_13, %c0_14] : memref<24x16xbf16, #tpu.memory_space<vmem>>, vector<24x16xbf16>
    %cst_15 = arith.constant dense<0.000000e+00> : vector<10x16xf32>
    %13 = tpu.matmul %11, %12, %cst_15 {dimension_numbers = #tpu.dot_dimension_numbers<[1], [0], [0], [1], [0, 0, 1, 1], [], []>} : vector<10x24xbf16>, vector<24x16xbf16>, vector<10x16xf32> -> vector<10x16xf32>
    %c0_16 = arith.constant 0 : index
    %c0_17 = arith.constant 0 : index
    %14 = vector.load %arg11[%c0_16, %c0_17] : memref<16x96xbf16, #tpu.memory_space<vmem>>, vector<16x96xbf16>
    %15 = arith.truncf %13 : vector<10x16xf32> to vector<10x16xbf16>
    %cst_18 = arith.constant dense<0.000000e+00> : vector<10x96xf32>
    %16 = tpu.matmul %15, %14, %cst_18 {dimension_numbers = #tpu.dot_dimension_numbers<[1], [0], [0], [1], [0, 0, 1, 1], [], []>} : vector<10x16xbf16>, vector<16x96xbf16>, vector<10x96xf32> -> vector<10x96xf32>
    %c0_19 = arith.constant 0 : index
    %c0_20 = arith.constant 0 : index
    %17 = vector.load %arg14[%c0_19, %c0_20] : memref<1x96xf32, #tpu.memory_space<vmem>>, vector<1x96xf32>
    %18 = vector.broadcast %17 : vector<1x96xf32> to vector<10x96xf32>
    %19 = arith.addf %16, %18 : vector<10x96xf32>
    %20 = vector.shape_cast %19 : vector<10x96xf32> to vector<5x2x96xf32>
    %c0_21 = arith.constant 0 : index
    %c0_22 = arith.constant 0 : index
    %c0_23 = arith.constant 0 : index
    %21 = vector.load %arg24[%c0_21, %c0_22, %c0_23] : memref<5x2x96xf32, #tpu.memory_space<vmem>>, vector<5x2x96xf32>
    tpu.vector_store %arg24[%c0_21, %c0_22, %c0_23], %20 {strides = array<i32>} : memref<5x2x96xf32, #tpu.memory_space<vmem>>, vector<5x2x96xf32>,
    %c0_24 = arith.constant 0 : index
    %c0_25 = arith.constant 0 : index
    %22 = vector.load %arg4[%c0_24, %c0_25] : memref<32x96xbf16, #tpu.memory_space<vmem>>, vector<32x96xbf16>
    %c0_26 = arith.constant 0 : index
    %c0_27 = arith.constant 0 : index
    %23 = vector.load %arg6[%c0_26, %c0_27] : memref<1x96xf32, #tpu.memory_space<vmem>>, vector<1x96xf32>
    %cst_28 = arith.constant 0.000000e+00 : f32
    %24 = vector.broadcast %cst_28 : f32 to vector<2x32xf32>
    %c0_i32 = arith.constant 0 : i32
    %c8_i32 = arith.constant 8 : i32
    %25 = arith.addi %c0_i32, %c8_i32 : i32
    %c1_i32 = arith.constant 1 : i32
    %26 = scf.for %arg27 = %c0_i32 to %25 step %c1_i32 iter_args(%arg28 = %24) -> (vector<2x32xf32>)  : i32 {
      %60 = arith.truncf %arg28 : vector<2x32xf32> to vector<2x32xbf16>
      %cst_68 = arith.constant dense<0.000000e+00> : vector<2x96xf32>
      %61 = tpu.matmul %60, %22, %cst_68 {dimension_numbers = #tpu.dot_dimension_numbers<[1], [0], [0], [1], [0, 0, 1, 1], [], []>} : vector<2x32xbf16>, vector<32x96xbf16>, vector<2x96xf32> -> vector<2x96xf32>
      %62 = vector.broadcast %23 : vector<1x96xf32> to vector<2x96xf32>
      %63 = arith.addf %61, %62 : vector<2x96xf32>
      %64 = arith.index_cast %arg27 : i32 to index
      %c0_69 = arith.constant 0 : index
      %c0_70 = arith.constant 0 : index
      %65 = vector.load %arg23[%64, %c0_69, %c0_70] : memref<8x2x96xf32, #tpu.memory_space<vmem>>, vector<1x2x96xf32>
      %66 = vector.shape_cast %65 : vector<1x2x96xf32> to vector<2x96xf32>
      %67 = vector.extract_strided_slice %66 {offsets = [0, 0], sizes = [2, 32], strides = [1, 1]} : vector<2x96xf32> to vector<2x32xf32>
      %68 = vector.extract_strided_slice %63 {offsets = [0, 0], sizes = [2, 32], strides = [1, 1]} : vector<2x96xf32> to vector<2x32xf32>
      %69 = arith.addf %67, %68 : vector<2x32xf32>
      %70 = arith.negf %69 : vector<2x32xf32>
      %71 = math.exp %70 : vector<2x32xf32>
      %cst_71 = arith.constant 1.000000e+00 : f32
      %72 = vector.broadcast %cst_71 : f32 to vector<2x32xf32>
      %73 = arith.addf %72, %71 : vector<2x32xf32>
      %74 = arith.divf %72, %73 : vector<2x32xf32>
      %75 = vector.extract_strided_slice %66 {offsets = [0, 32], sizes = [2, 32], strides = [1, 1]} : vector<2x96xf32> to vector<2x32xf32>
      %76 = vector.extract_strided_slice %63 {offsets = [0, 32], sizes = [2, 32], strides = [1, 1]} : vector<2x96xf32> to vector<2x32xf32>
      %77 = arith.addf %75, %76 : vector<2x32xf32>
      %78 = arith.negf %77 : vector<2x32xf32>
      %79 = math.exp %78 : vector<2x32xf32>
      %cst_72 = arith.constant 1.000000e+00 : f32
      %80 = vector.broadcast %cst_72 : f32 to vector<2x32xf32>
      %81 = arith.addf %80, %79 : vector<2x32xf32>
      %82 = arith.divf %80, %81 : vector<2x32xf32>
      %83 = vector.extract_strided_slice %66 {offsets = [0, 64], sizes = [2, 32], strides = [1, 1]} : vector<2x96xf32> to vector<2x32xf32>
      %84 = vector.extract_strided_slice %63 {offsets = [0, 64], sizes = [2, 32], strides = [1, 1]} : vector<2x96xf32> to vector<2x32xf32>
      %85 = arith.mulf %74, %84 : vector<2x32xf32>
      %86 = arith.addf %83, %85 : vector<2x32xf32>
      %87 = math.tanh %86 : vector<2x32xf32>
      %cst_73 = arith.constant 1.000000e+00 : f32
      %88 = vector.broadcast %cst_73 : f32 to vector<2x32xf32>
      %89 = arith.subf %88, %82 : vector<2x32xf32>
      %90 = arith.mulf %89, %87 : vector<2x32xf32>
      %91 = arith.mulf %82, %arg28 : vector<2x32xf32>
      %92 = arith.addf %90, %91 : vector<2x32xf32>
      %93 = arith.index_cast %arg27 : i32 to index
      %c0_74 = arith.constant 0 : index
      %c0_75 = arith.constant 0 : index
      %94 = vector.load %arg22[%93, %c0_74, %c0_75] : memref<8x2x32xf32, #tpu.memory_space<vmem>>, vector<1x2x32xf32>
      %95 = vector.shape_cast %94 : vector<1x2x32xf32> to vector<2x32xf32>
      %96 = vector.shape_cast %92 : vector<2x32xf32> to vector<1x2x32xf32>
      tpu.vector_store %arg22[%93, %c0_74, %c0_75], %96 {strides = array<i32>} : memref<8x2x32xf32, #tpu.memory_space<vmem>>, vector<1x2x32xf32>,
      scf.yield %92 : vector<2x32xf32>
    }
    %c8_i32_29 = arith.constant 8 : i32
    %c0_30 = arith.constant 0 : index
    %c0_31 = arith.constant 0 : index
    %c0_32 = arith.constant 0 : index
    %27 = vector.load %arg22[%c0_30, %c0_31, %c0_32] : memref<8x2x32xf32, #tpu.memory_space<vmem>>, vector<8x2x32xf32>
    %28 = tpu.transpose %27, [1, 0, 2] : vector<8x2x32xf32> -> vector<2x8x32xf32>
    %29 = vector.shape_cast %28 : vector<2x8x32xf32> to vector<16x32xf32>
    %c0_33 = arith.constant 0 : index
    %c0_34 = arith.constant 0 : index
    %30 = vector.load %arg8[%c0_33, %c0_34] : memref<32x32xbf16, #tpu.memory_space<vmem>>, vector<32x32xbf16>
    %31 = arith.truncf %29 : vector<16x32xf32> to vector<16x32xbf16>
    %cst_35 = arith.constant dense<0.000000e+00> : vector<16x32xf32>
    %32 = tpu.matmul %31, %30, %cst_35 {dimension_numbers = #tpu.dot_dimension_numbers<[1], [0], [0], [1], [0, 0, 1, 1], [], []>} : vector<16x32xbf16>, vector<32x32xbf16>, vector<16x32xf32> -> vector<16x32xf32>
    %33 = vector.shape_cast %32 : vector<16x32xf32> to vector<2x8x32xf32>
    %c0_36 = arith.constant 0 : index
    %c0_37 = arith.constant 0 : index
    %34 = vector.load %arg7[%c0_36, %c0_37] : memref<32x32xbf16, #tpu.memory_space<vmem>>, vector<32x32xbf16>
    %c0_38 = arith.constant 0 : index
    %c0_39 = arith.constant 0 : index
    %35 = vector.load %arg9[%c0_38, %c0_39] : memref<1x32xf32, #tpu.memory_space<vmem>>, vector<1x32xf32>
    %c0_40 = arith.constant 0 : index
    %c0_41 = arith.constant 0 : index
    %36 = vector.load %arg12[%c0_40, %c0_41] : memref<32x96xbf16, #tpu.memory_space<vmem>>, vector<32x96xbf16>
    %c0_42 = arith.constant 0 : index
    %c0_43 = arith.constant 0 : index
    %37 = vector.load %arg13[%c0_42, %c0_43] : memref<32x96xbf16, #tpu.memory_space<vmem>>, vector<32x96xbf16>
    %c0_44 = arith.constant 0 : index
    %c0_45 = arith.constant 0 : index
    %38 = vector.load %arg15[%c0_44, %c0_45] : memref<1x96xf32, #tpu.memory_space<vmem>>, vector<1x96xf32>
    %c0_i32_46 = arith.constant 0 : i32
    %c5_i32 = arith.constant 5 : i32
    %39 = arith.addi %c0_i32_46, %c5_i32 : i32
    %c1_i32_47 = arith.constant 1 : i32
    %40 = scf.for %arg27 = %c0_i32_46 to %39 step %c1_i32_47 iter_args(%arg28 = %26) -> (vector<2x32xf32>)  : i32 {
      %60 = arith.truncf %arg28 : vector<2x32xf32> to vector<2x32xbf16>
      %cst_68 = arith.constant dense<0.000000e+00> : vector<2x32xf32>
      %61 = tpu.matmul %60, %34, %cst_68 {dimension_numbers = #tpu.dot_dimension_numbers<[1], [0], [0], [1], [0, 0, 1, 1], [], []>} : vector<2x32xbf16>, vector<32x32xbf16>, vector<2x32xf32> -> vector<2x32xf32>
      %62 = vector.shape_cast %61 : vector<2x32xf32> to vector<2x1x32xf32>
      %63 = vector.broadcast %62 : vector<2x1x32xf32> to vector<2x8x32xf32>
      %64 = arith.addf %33, %63 : vector<2x8x32xf32>
      %65 = math.tanh %64 : vector<2x8x32xf32>
      %66 = vector.shape_cast %35 : vector<1x32xf32> to vector<1x1x32xf32>
      %67 = vector.broadcast %66 : vector<1x1x32xf32> to vector<2x8x32xf32>
      %68 = arith.mulf %65, %67 : vector<2x8x32xf32>
      %cst_69 = arith.constant dense<0.000000e+00> : vector<2x8xf32>
      %69 = vector.multi_reduction <add>, %68, %cst_69 [2] : vector<2x8x32xf32> to vector<2x8xf32>
      %cst_70 = arith.constant dense<0xFF800000> : vector<2xf32>
      %70 = vector.multi_reduction <maximumf>, %69, %cst_70 [1] : vector<2x8xf32> to vector<2xf32>
      %71 = vector.shape_cast %70 : vector<2xf32> to vector<2x1xf32>
      %72 = vector.broadcast %71 : vector<2x1xf32> to vector<2x8xf32>
      %73 = arith.subf %69, %72 : vector<2x8xf32>
      %74 = math.exp %73 : vector<2x8xf32>
      %cst_71 = arith.constant dense<0.000000e+00> : vector<2xf32>
      %75 = vector.multi_reduction <add>, %74, %cst_71 [1] : vector<2x8xf32> to vector<2xf32>
      %76 = vector.shape_cast %75 : vector<2xf32> to vector<2x1xf32>
      %77 = tpu.reciprocal %76 {approx = true} : vector<2x1xf32> -> vector<2x1xf32>
      %78 = vector.broadcast %77 : vector<2x1xf32> to vector<2x8xf32>
      %79 = arith.mulf %74, %78 : vector<2x8xf32>
      %80 = vector.shape_cast %79 : vector<2x8xf32> to vector<2x8x1xf32>
      %81 = vector.broadcast %80 : vector<2x8x1xf32> to vector<2x8x32xf32>
      %82 = arith.mulf %81, %28 : vector<2x8x32xf32>
      %cst_72 = arith.constant dense<0.000000e+00> : vector<2x32xf32>
      %83 = vector.multi_reduction <add>, %82, %cst_72 [1] : vector<2x8x32xf32> to vector<2x32xf32>
      %84 = arith.index_cast %arg27 : i32 to index
      %c0_73 = arith.constant 0 : index
      %c0_74 = arith.constant 0 : index
      %85 = vector.load %arg24[%84, %c0_73, %c0_74] : memref<5x2x96xf32, #tpu.memory_space<vmem>>, vector<1x2x96xf32>
      %86 = vector.shape_cast %85 : vector<1x2x96xf32> to vector<2x96xf32>
      %87 = arith.truncf %83 : vector<2x32xf32> to vector<2x32xbf16>
      %cst_75 = arith.constant dense<0.000000e+00> : vector<2x96xf32>
      %88 = tpu.matmul %87, %36, %cst_75 {dimension_numbers = #tpu.dot_dimension_numbers<[1], [0], [0], [1], [0, 0, 1, 1], [], []>} : vector<2x32xbf16>, vector<32x96xbf16>, vector<2x96xf32> -> vector<2x96xf32>
      %89 = arith.addf %86, %88 : vector<2x96xf32>
      %90 = arith.truncf %arg28 : vector<2x32xf32> to vector<2x32xbf16>
      %cst_76 = arith.constant dense<0.000000e+00> : vector<2x96xf32>
      %91 = tpu.matmul %90, %37, %cst_76 {dimension_numbers = #tpu.dot_dimension_numbers<[1], [0], [0], [1], [0, 0, 1, 1], [], []>} : vector<2x32xbf16>, vector<32x96xbf16>, vector<2x96xf32> -> vector<2x96xf32>
      %92 = vector.broadcast %38 : vector<1x96xf32> to vector<2x96xf32>
      %93 = arith.addf %91, %92 : vector<2x96xf32>
      %94 = vector.extract_strided_slice %89 {offsets = [0, 0], sizes = [2, 32], strides = [1, 1]} : vector<2x96xf32> to vector<2x32xf32>
      %95 = vector.extract_strided_slice %93 {offsets = [0, 0], sizes = [2, 32], strides = [1, 1]} : vector<2x96xf32> to vector<2x32xf32>
      %96 = arith.addf %94, %95 : vector<2x32xf32>
      %97 = arith.negf %96 : vector<2x32xf32>
      %98 = math.exp %97 : vector<2x32xf32>
      %cst_77 = arith.constant 1.000000e+00 : f32
      %99 = vector.broadcast %cst_77 : f32 to vector<2x32xf32>
      %100 = arith.addf %99, %98 : vector<2x32xf32>
      %101 = arith.divf %99, %100 : vector<2x32xf32>
      %102 = vector.extract_strided_slice %89 {offsets = [0, 32], sizes = [2, 32], strides = [1, 1]} : vector<2x96xf32> to vector<2x32xf32>
      %103 = vector.extract_strided_slice %93 {offsets = [0, 32], sizes = [2, 32], strides = [1, 1]} : vector<2x96xf32> to vector<2x32xf32>
      %104 = arith.addf %102, %103 : vector<2x32xf32>
      %105 = arith.negf %104 : vector<2x32xf32>
      %106 = math.exp %105 : vector<2x32xf32>
      %cst_78 = arith.constant 1.000000e+00 : f32
      %107 = vector.broadcast %cst_78 : f32 to vector<2x32xf32>
      %108 = arith.addf %107, %106 : vector<2x32xf32>
      %109 = arith.divf %107, %108 : vector<2x32xf32>
      %110 = vector.extract_strided_slice %89 {offsets = [0, 64], sizes = [2, 32], strides = [1, 1]} : vector<2x96xf32> to vector<2x32xf32>
      %111 = vector.extract_strided_slice %93 {offsets = [0, 64], sizes = [2, 32], strides = [1, 1]} : vector<2x96xf32> to vector<2x32xf32>
      %112 = arith.mulf %101, %111 : vector<2x32xf32>
      %113 = arith.addf %110, %112 : vector<2x32xf32>
      %114 = math.tanh %113 : vector<2x32xf32>
      %cst_79 = arith.constant 1.000000e+00 : f32
      %115 = vector.broadcast %cst_79 : f32 to vector<2x32xf32>
      %116 = arith.subf %115, %109 : vector<2x32xf32>
      %117 = arith.mulf %116, %114 : vector<2x32xf32>
      %118 = arith.mulf %109, %arg28 : vector<2x32xf32>
      %119 = arith.addf %117, %118 : vector<2x32xf32>
      %120 = arith.index_cast %arg27 : i32 to index
      %c0_80 = arith.constant 0 : index
      %c0_81 = arith.constant 0 : index
      %121 = vector.load %arg21[%120, %c0_80, %c0_81] : memref<5x2x8xf32, #tpu.memory_space<vmem>>, vector<1x2x8xf32>
      %122 = vector.shape_cast %121 : vector<1x2x8xf32> to vector<2x8xf32>
      %123 = vector.shape_cast %79 : vector<2x8xf32> to vector<1x2x8xf32>
      tpu.vector_store %arg21[%120, %c0_80, %c0_81], %123 {strides = array<i32>} : memref<5x2x8xf32, #tpu.memory_space<vmem>>, vector<1x2x8xf32>,
      %124 = arith.index_cast %arg27 : i32 to index
      %c0_82 = arith.constant 0 : index
      %c0_83 = arith.constant 0 : index
      %125 = vector.load %arg26[%124, %c0_82, %c0_83] : memref<5x2x32xf32, #tpu.memory_space<vmem>>, vector<1x2x32xf32>
      %126 = vector.shape_cast %125 : vector<1x2x32xf32> to vector<2x32xf32>
      %127 = vector.shape_cast %83 : vector<2x32xf32> to vector<1x2x32xf32>
      tpu.vector_store %arg26[%124, %c0_82, %c0_83], %127 {strides = array<i32>} : memref<5x2x32xf32, #tpu.memory_space<vmem>>, vector<1x2x32xf32>,
      %128 = arith.index_cast %arg27 : i32 to index
      %c0_84 = arith.constant 0 : index
      %c0_85 = arith.constant 0 : index
      %129 = vector.load %arg25[%128, %c0_84, %c0_85] : memref<5x2x32xf32, #tpu.memory_space<vmem>>, vector<1x2x32xf32>
      %130 = vector.shape_cast %129 : vector<1x2x32xf32> to vector<2x32xf32>
      %131 = vector.shape_cast %119 : vector<2x32xf32> to vector<1x2x32xf32>
      tpu.vector_store %arg25[%128, %c0_84, %c0_85], %131 {strides = array<i32>} : memref<5x2x32xf32, #tpu.memory_space<vmem>>, vector<1x2x32xf32>,
      scf.yield %119 : vector<2x32xf32>
    }
    %c5_i32_48 = arith.constant 5 : i32
    %c0_49 = arith.constant 0 : index
    %c0_50 = arith.constant 0 : index
    %c0_51 = arith.constant 0 : index
    %41 = vector.load %arg25[%c0_49, %c0_50, %c0_51] : memref<5x2x32xf32, #tpu.memory_space<vmem>>, vector<5x2x32xf32>
    %42 = vector.shape_cast %41 : vector<5x2x32xf32> to vector<10x32xf32>
    %c0_52 = arith.constant 0 : index
    %c0_53 = arith.constant 0 : index
    %c0_54 = arith.constant 0 : index
    %43 = vector.load %arg26[%c0_52, %c0_53, %c0_54] : memref<5x2x32xf32, #tpu.memory_space<vmem>>, vector<5x2x32xf32>
    %44 = vector.shape_cast %43 : vector<5x2x32xf32> to vector<10x32xf32>
    %c0_55 = arith.constant 0 : index
    %c0_56 = arith.constant 0 : index
    %45 = vector.load %arg16[%c0_55, %c0_56] : memref<32x24xbf16, #tpu.memory_space<vmem>>, vector<32x24xbf16>
    %46 = arith.truncf %42 : vector<10x32xf32> to vector<10x32xbf16>
    %cst_57 = arith.constant dense<0.000000e+00> : vector<10x24xf32>
    %47 = tpu.matmul %46, %45, %cst_57 {dimension_numbers = #tpu.dot_dimension_numbers<[1], [0], [0], [1], [0, 0, 1, 1], [], []>} : vector<10x32xbf16>, vector<32x24xbf16>, vector<10x24xf32> -> vector<10x24xf32>
    %c0_58 = arith.constant 0 : index
    %c0_59 = arith.constant 0 : index
    %48 = vector.load %arg17[%c0_58, %c0_59] : memref<32x24xbf16, #tpu.memory_space<vmem>>, vector<32x24xbf16>
    %49 = arith.truncf %44 : vector<10x32xf32> to vector<10x32xbf16>
    %cst_60 = arith.constant dense<0.000000e+00> : vector<10x24xf32>
    %50 = tpu.matmul %49, %48, %cst_60 {dimension_numbers = #tpu.dot_dimension_numbers<[1], [0], [0], [1], [0, 0, 1, 1], [], []>} : vector<10x32xbf16>, vector<32x24xbf16>, vector<10x24xf32> -> vector<10x24xf32>
    %51 = arith.addf %47, %50 : vector<10x24xf32>
    %c0_61 = arith.constant 0 : index
    %c0_62 = arith.constant 0 : index
    %52 = vector.load %arg18[%c0_61, %c0_62] : memref<16x24xbf16, #tpu.memory_space<vmem>>, vector<16x24xbf16>
    %53 = arith.truncf %13 : vector<10x16xf32> to vector<10x16xbf16>
    %cst_63 = arith.constant dense<0.000000e+00> : vector<10x24xf32>
    %54 = tpu.matmul %53, %52, %cst_63 {dimension_numbers = #tpu.dot_dimension_numbers<[1], [0], [0], [1], [0, 0, 1, 1], [], []>} : vector<10x16xbf16>, vector<16x24xbf16>, vector<10x24xf32> -> vector<10x24xf32>
    %55 = arith.addf %51, %54 : vector<10x24xf32>
    %c0_64 = arith.constant 0 : index
    %c0_65 = arith.constant 0 : index
    %56 = vector.load %arg19[%c0_64, %c0_65] : memref<1x24xf32, #tpu.memory_space<vmem>>, vector<1x24xf32>
    %57 = vector.broadcast %56 : vector<1x24xf32> to vector<10x24xf32>
    %58 = arith.addf %55, %57 : vector<10x24xf32>
    %c0_66 = arith.constant 0 : index
    %c0_67 = arith.constant 0 : index
    %59 = vector.load %arg20[%c0_66, %c0_67] : memref<10x24xf32, #tpu.memory_space<vmem>>, vector<10x24xf32>
    tpu.vector_store %arg20[%c0_66, %c0_67], %58 {strides = array<i32>} : memref<10x24xf32, #tpu.memory_space<vmem>>, vector<10x24xf32>,
    return
  }
}

</mosaic_0001>

<llo_original>
// kernel: tpu_custom_call.1
$region0: #{tpu_custom_call.1}
  #allocation0 [shape = 'u32[]', space=smem, size = 0x4, offset = 0x4, fixed_abs, tag = 'smem constant byte address 0x4 - core index']
  #allocation1 [shape = 'u32[144,128]{1,0:T(1,128)}', space=vmem, size = 0x12000, scoped, tag = 'internal scratch']
  #allocation2 [shape = 'f32[8,2,32]{2,1,0:T(2,128)}', space=vmem, size = 0x2000, scoped, tag = 'scratch operand']
  #allocation3 [shape = 'f32[8,2,96]{2,1,0:T(2,128)}', space=vmem, size = 0x2000, scoped, tag = 'scratch operand']
  #allocation4 [shape = 'f32[5,2,96]{2,1,0:T(2,128)}', space=vmem, size = 0x1400, scoped, tag = 'scratch operand']
  #allocation5 [shape = 'f32[5,2,32]{2,1,0:T(2,128)}', space=vmem, size = 0x1400, scoped, tag = 'scratch operand']
  #allocation6 [shape = 'f32[5,2,32]{2,1,0:T(2,128)}', space=vmem, size = 0x1400, scoped, tag = 'scratch operand']
  %s0 = inlined_call_operand.hbm [shape: bf16[16,20], index: 0, kind: input, shape index: {}]
  %s1 = inlined_call_operand.hbm [shape: bf16[10,24], index: 1, kind: input, shape index: {}]
  %s2 = inlined_call_operand.hbm [shape: bf16[20,16], index: 2, kind: input, shape index: {}]
  %s3 = inlined_call_operand.hbm [shape: bf16[16,96], index: 3, kind: input, shape index: {}]
  %s4 = inlined_call_operand.hbm [shape: bf16[32,96], index: 4, kind: input, shape index: {}]
  %s5 = inlined_call_operand.hbm [shape: f32[1,96], index: 5, kind: input, shape index: {}]
  %s6 = inlined_call_operand.hbm [shape: f32[1,96], index: 6, kind: input, shape index: {}]
  %s7 = inlined_call_operand.hbm [shape: bf16[32,32], index: 7, kind: input, shape index: {}]
  %s8 = inlined_call_operand.hbm [shape: bf16[32,32], index: 8, kind: input, shape index: {}]
  %s9 = inlined_call_operand.hbm [shape: f32[1,32], index: 9, kind: input, shape index: {}]
  %s10 = inlined_call_operand.hbm [shape: bf16[24,16], index: 10, kind: input, shape index: {}]
  %s11 = inlined_call_operand.hbm [shape: bf16[16,96], index: 11, kind: input, shape index: {}]
  %s12 = inlined_call_operand.hbm [shape: bf16[32,96], index: 12, kind: input, shape index: {}]
  %s13 = inlined_call_operand.hbm [shape: bf16[32,96], index: 13, kind: input, shape index: {}]
  %s14 = inlined_call_operand.hbm [shape: f32[1,96], index: 14, kind: input, shape index: {}]
  %s15 = inlined_call_operand.hbm [shape: f32[1,96], index: 15, kind: input, shape index: {}]
  %s16 = inlined_call_operand.hbm [shape: bf16[32,24], index: 16, kind: input, shape index: {}]
  %s17 = inlined_call_operand.hbm [shape: bf16[32,24], index: 17, kind: input, shape index: {}]
  %s18 = inlined_call_operand.hbm [shape: bf16[16,24], index: 18, kind: input, shape index: {}]
  %s19 = inlined_call_operand.hbm [shape: f32[1,24], index: 19, kind: input, shape index: {}]
  %s20 = inlined_call_operand.hbm [shape: f32[10,24], index: 20, kind: output, shape index: {0}]
  %s21 = inlined_call_operand.hbm [shape: f32[5,2,8], index: 21, kind: output, shape index: {1}]
  %22 = xla_tuple %s20, %s21
  %s23 = sld [smem:[#allocation0]]
  $region192: #{tpu_custom_call.1} parent=0
    _
  %s25 = ssub.s32 1, %s23
  %s26 = scalar_select 0, %s25, %s23
  $region1: #{tpu_custom_call.1} parent=0
    #allocation7 [shape = 'u8[4096]{0}', space=vmem, size = 0x1000, scoped, tag = 'input window, operand 0, single buffered']
    #allocation8 [shape = 's32[1]{0}', space=sflag, size = 0x4, scoped, tag = 'scoped memory for tpu_custom_call.1']
    #allocation9 [shape = 's32[1]{0}', space=sflag, size = 0x4, scoped, tag = 'scoped memory for tpu_custom_call.1']
    #allocation10 [shape = 'u8[4096]{0}', space=vmem, size = 0x1000, scoped, tag = 'input window, operand 1, single buffered']
    #allocation11 [shape = 's32[1]{0}', space=sflag, size = 0x4, scoped, tag = 'scoped memory for tpu_custom_call.1']
    #allocation12 [shape = 'u8[6144]{0}', space=vmem, size = 0x1800, scoped, tag = 'input window, operand 2, single buffered']
    #allocation13 [shape = 'u8[4096]{0}', space=vmem, size = 0x1000, scoped, tag = 'input window, operand 3, single buffered']
    #allocation14 [shape = 's32[1]{0}', space=sflag, size = 0x4, scoped, tag = 'scoped memory for tpu_custom_call.1']
    #allocation15 [shape = 'u8[8192]{0}', space=vmem, size = 0x2000, scoped, tag = 'input window, operand 4, single buffered']
    #allocation16 [shape = 'u8[512]{0}', space=vmem, size = 0x400, scoped, tag = 'input window, operand 5, single buffered']
    #allocation17 [shape = 's32[1]{0}', space=sflag, size = 0x4, scoped, tag = 'scoped memory for tpu_custom_call.1']
    #allocation18 [shape = 'u8[512]{0}', space=vmem, size = 0x400, scoped, tag = 'input window, operand 6, single buffered']
    #allocation19 [shape = 'u8[8192]{0}', space=vmem, size = 0x2000, scoped, tag = 'input window, operand 7, single buffered']
    #allocation20 [shape = 's32[1]{0}', space=sflag, size = 0x4, scoped, tag = 'scoped memory for tpu_custom_call.1']
    #allocation21 [shape = 'u8[8192]{0}', space=vmem, size = 0x2000, scoped, tag = 'input window, operand 8, single buffered']
    #allocation22 [shape = 'u8[512]{0}', space=vmem, size = 0x400, scoped, tag = 'input window, operand 9, single buffered']
    #allocation23 [shape = 's32[1]{0}', space=sflag, size = 0x4, scoped, tag = 'scoped memory for tpu_custom_call.1']
    #allocation24 [shape = 'u8[6144]{0}', space=vmem, size = 0x1800, scoped, tag = 'input window, operand 10, single buffered']
    #allocation25 [shape = 'u8[4096]{0}', space=vmem, size = 0x1000, scoped, tag = 'input window, operand 11, single buffered']
    #allocation26 [shape = 's32[1]{0}', space=sflag, size = 0x4, scoped, tag = 'scoped memory for tpu_custom_call.1']
    #allocation27 [shape = 'u8[8192]{0}', space=vmem, size = 0x2000, scoped, tag = 'input window, operand 12, single buffered']
    #allocation28 [shape = 'u8[8192]{0}', space=vmem, size = 0x2000, scoped, tag = 'input window, operand 13, single buffered']
    #allocation29 [shape = 's32[1]{0}', space=sflag, size = 0x4, scoped, tag = 'scoped memory for tpu_custom_call.1']
    #allocation30 [shape = 'u8[512]{0}', space=vmem, size = 0x400, scoped, tag = 'input window, operand 14, single buffered']
    #allocation31 [shape = 'u8[512]{0}', space=vmem, size = 0x400, scoped, tag = 'input window, operand 15, single buffered']
    #allocation32 [shape = 's32[1]{0}', space=sflag, size = 0x4, scoped, tag = 'scoped memory for tpu_custom_call.1']
    #allocation33 [shape = 'u8[8192]{0}', space=vmem, size = 0x2000, scoped, tag = 'input window, operand 16, single buffered']
    #allocation34 [shape = 'u8[8192]{0}', space=vmem, size = 0x2000, scoped, tag = 'input window, operand 17, single buffered']
    #allocation35 [shape = 's32[1]{0}', space=sflag, size = 0x4, scoped, tag = 'scoped memory for tpu_custom_call.1']
    #allocation36 [shape = 'u8[4096]{0}', space=vmem, size = 0x1000, scoped, tag = 'input window, operand 18, single buffered']
    #allocation37 [shape = 'u8[512]{0}', space=vmem, size = 0x400, scoped, tag = 'input window, operand 19, single buffered']
    #allocation38 [shape = 's32[1]{0}', space=sflag, size = 0x4, scoped, tag = 'scoped memory for tpu_custom_call.1']
    #allocation39 [shape = 'u8[8192]{0}', space=vmem, size = 0x2000, scoped, tag = 'output window, operand 0, single buffered']
    #allocation40 [shape = 'u8[5120]{0}', space=vmem, size = 0x1400, scoped, tag = 'output window, operand 1, single buffered']
    #allocation41 [shape = 's32[1]{0}', space=sflag, size = 0x4, scoped, tag = 'scoped memory for tpu_custom_call.1']
    %27 = vsyncpa [#allocation8], 0
    %28 = vsyncpa [#allocation11], 0
    %29 = vsyncpa [#allocation14], 0
    %30 = vsyncpa [#allocation17], 0
    %31 = vsyncpa [#allocation20], 0
    %32 = vsyncpa [#allocation23], 0
    %33 = vsyncpa [#allocation26], 0
    %34 = vsyncpa [#allocation29], 0
    %35 = vsyncpa [#allocation32], 0
    %36 = vsyncpa [#allocation35], 0
    %37 = vsyncpa [#allocation38], 0
    %38 = vsyncpa [#allocation9], 0
    %39 = vsyncpa [#allocation41], 0
    // Predicated region
    $region2: #{tpu_custom_call.1} parent=1 // pred_check
      _
    $region3: #{tpu_custom_call.1} parent=1 // pred_check_branch
      %41 = sbr.rel (0) target = $region5
    $region4: #{tpu_custom_call.1} parent=1 // pred_region
      %s43 = ssub.s32 128, 128
      %44 = vsyncadd [#allocation8], %s43
      %s45 = sshll.u32 [#allocation7], 4
      %s46 = int_to_ptr.vmem [resolvable:$true] %s45
      %51 = dma.hbm_to_vmem [thread:$0]  %s0, 128, %s46, [#allocation8], 64, 64, 4
    $region5: #{tpu_custom_call.1} parent=1 // pred_fallthru
      _
    // Predicated region
    $region6: #{tpu_custom_call.1} parent=1 // pred_check
      _
    $region7: #{tpu_custom_call.1} parent=1 // pred_check_branch
      %53 = sbr.rel (0) target = $region9
    $region8: #{tpu_custom_call.1} parent=1 // pred_region
      %s55 = ssub.s32 128, 128
      %56 = vsyncadd [#allocation11], %s55
      %s57 = sshll.u32 [#allocation10], 4
      %s58 = int_to_ptr.vmem [resolvable:$true] %s57
      %63 = dma.hbm_to_vmem [thread:$0]  %s1, 128, %s58, [#allocation11], 64, 64, 4
    $region9: #{tpu_custom_call.1} parent=1 // pred_fallthru
      _
    // Predicated region
    $region10: #{tpu_custom_call.1} parent=1 // pred_check
      _
    $region11: #{tpu_custom_call.1} parent=1 // pred_check_branch
      %65 = sbr.rel (0) target = $region13
    $region12: #{tpu_custom_call.1} parent=1 // pred_region
      %s67 = ssub.s32 192, 192
      %68 = vsyncadd [#allocation11], %s67
      %s69 = sshll.u32 [#allocation12], 4
      %s70 = int_to_ptr.vmem [resolvable:$true] %s69
      %75 = dma.hbm_to_vmem [thread:$0]  %s2, 192, %s70, [#allocation11], 64, 64, 4
    $region13: #{tpu_custom_call.1} parent=1 // pred_fallthru
      _
    // Predicated region
    $region14: #{tpu_custom_call.1} parent=1 // pred_check
      _
    $region15: #{tpu_custom_call.1} parent=1 // pred_check_branch
      %77 = sbr.rel (0) target = $region17
    $region16: #{tpu_custom_call.1} parent=1 // pred_region
      %s79 = ssub.s32 128, 128
      %80 = vsyncadd [#allocation14], %s79
      %s81 = sshll.u32 [#allocation13], 4
      %s82 = int_to_ptr.vmem [resolvable:$true] %s81
      %87 = dma.hbm_to_vmem [thread:$0]  %s3, 128, %s82, [#allocation14], 64, 64, 4
    $region17: #{tpu_custom_call.1} parent=1 // pred_fallthru
      _
    // Predicated region
    $region18: #{tpu_custom_call.1} parent=1 // pred_check
      _
    $region19: #{tpu_custom_call.1} parent=1 // pred_check_branch
      %89 = sbr.rel (0) target = $region21
    $region20: #{tpu_custom_call.1} parent=1 // pred_region
      %s91 = ssub.s32 256, 256
      %92 = vsyncadd [#allocation14], %s91
      %s93 = sshll.u32 [#allocation15], 4
      %s94 = int_to_ptr.vmem [resolvable:$true] %s93
      %99 = dma.hbm_to_vmem [thread:$0]  %s4, 256, %s94, [#allocation14], 64, 64, 4
    $region21: #{tpu_custom_call.1} parent=1 // pred_fallthru
      _
    // Predicated region
    $region22: #{tpu_custom_call.1} parent=1 // pred_check
      _
    $region23: #{tpu_custom_call.1} parent=1 // pred_check_branch
      %101 = sbr.rel (0) target = $region25
    $region24: #{tpu_custom_call.1} parent=1 // pred_region
      %s103 = ssub.s32 16, 16
      %104 = vsyncadd [#allocation17], %s103
      %s106 = sshll.u32 [#allocation16], 4
      %s107 = int_to_ptr.vmem [resolvable:$true] %s106
      %109 = dma.hbm_to_vmem [thread:$0]  %s5, 16, %s107, [#allocation17]
    $region25: #{tpu_custom_call.1} parent=1 // pred_fallthru
      _
    // Predicated region
    $region26: #{tpu_custom_call.1} parent=1 // pred_check
      _
    $region27: #{tpu_custom_call.1} parent=1 // pred_check_branch
      %111 = sbr.rel (0) target = $region29
    $region28: #{tpu_custom_call.1} parent=1 // pred_region
      %s113 = ssub.s32 16, 16
      %114 = vsyncadd [#allocation17], %s113
      %s116 = sshll.u32 [#allocation18], 4
      %s117 = int_to_ptr.vmem [resolvable:$true] %s116
      %119 = dma.hbm_to_vmem [thread:$0]  %s6, 16, %s117, [#allocation17]
    $region29: #{tpu_custom_call.1} parent=1 // pred_fallthru
      _
    // Predicated region
    $region30: #{tpu_custom_call.1} parent=1 // pred_check
      _
    $region31: #{tpu_custom_call.1} parent=1 // pred_check_branch
      %121 = sbr.rel (0) target = $region33
    $region32: #{tpu_custom_call.1} parent=1 // pred_region
      %s123 = ssub.s32 256, 256
      %124 = vsyncadd [#allocation20], %s123
      %s125 = sshll.u32 [#allocation19], 4
      %s126 = int_to_ptr.vmem [resolvable:$true] %s125
      %131 = dma.hbm_to_vmem [thread:$0]  %s7, 256, %s126, [#allocation20], 64, 64, 4
    $region33: #{tpu_custom_call.1} parent=1 // pred_fallthru
      _
    // Predicated region
    $region34: #{tpu_custom_call.1} parent=1 // pred_check
      _
    $region35: #{tpu_custom_call.1} parent=1 // pred_check_branch
      %133 = sbr.rel (0) target = $region37
    $region36: #{tpu_custom_call.1} parent=1 // pred_region
      %s135 = ssub.s32 256, 256
      %136 = vsyncadd [#allocation20], %s135
      %s137 = sshll.u32 [#allocation21], 4
      %s138 = int_to_ptr.vmem [resolvable:$true] %s137
      %143 = dma.hbm_to_vmem [thread:$0]  %s8, 256, %s138, [#allocation20], 64, 64, 4
    $region37: #{tpu_custom_call.1} parent=1 // pred_fallthru
      _
    // Predicated region
    $region38: #{tpu_custom_call.1} parent=1 // pred_check
      _
    $region39: #{tpu_custom_call.1} parent=1 // pred_check_branch
      %145 = sbr.rel (0) target = $region41
    $region40: #{tpu_custom_call.1} parent=1 // pred_region
      %s147 = ssub.s32 16, 16
      %148 = vsyncadd [#allocation23], %s147
      %s150 = sshll.u32 [#allocation22], 4
      %s151 = int_to_ptr.vmem [resolvable:$true] %s150
      %153 = dma.hbm_to_vmem [thread:$0]  %s9, 16, %s151, [#allocation23]
    $region41: #{tpu_custom_call.1} parent=1 // pred_fallthru
      _
    // Predicated region
    $region42: #{tpu_custom_call.1} parent=1 // pred_check
      _
    $region43: #{tpu_custom_call.1} parent=1 // pred_check_branch
      %155 = sbr.rel (0) target = $region45
    $region44: #{tpu_custom_call.1} parent=1 // pred_region
      %s157 = ssub.s32 192, 192
      %158 = vsyncadd [#allocation23], %s157
      %s159 = sshll.u32 [#allocation24], 4
      %s160 = int_to_ptr.vmem [resolvable:$true] %s159
      %165 = dma.hbm_to_vmem [thread:$0]  %s10, 192, %s160, [#allocation23], 64, 64, 4
    $region45: #{tpu_custom_call.1} parent=1 // pred_fallthru
      _
    // Predicated region
    $region46: #{tpu_custom_call.1} parent=1 // pred_check
      _
    $region47: #{tpu_custom_call.1} parent=1 // pred_check_branch
      %167 = sbr.rel (0) target = $region49
    $region48: #{tpu_custom_call.1} parent=1 // pred_region
      %s169 = ssub.s32 128, 128
      %170 = vsyncadd [#allocation26], %s169
      %s171 = sshll.u32 [#allocation25], 4
      %s172 = int_to_ptr.vmem [resolvable:$true] %s171
      %177 = dma.hbm_to_vmem [thread:$0]  %s11, 128, %s172, [#allocation26], 64, 64, 4
    $region49: #{tpu_custom_call.1} parent=1 // pred_fallthru
      _
    // Predicated region
    $region50: #{tpu_custom_call.1} parent=1 // pred_check
      _
    $region51: #{tpu_custom_call.1} parent=1 // pred_check_branch
      %179 = sbr.rel (0) target = $region53
    $region52: #{tpu_custom_call.1} parent=1 // pred_region
      %s181 = ssub.s32 256, 256
      %182 = vsyncadd [#allocation26], %s181
      %s183 = sshll.u32 [#allocation27], 4
      %s184 = int_to_ptr.vmem [resolvable:$true] %s183
      %189 = dma.hbm_to_vmem [thread:$0]  %s12, 256, %s184, [#allocation26], 64, 64, 4
    $region53: #{tpu_custom_call.1} parent=1 // pred_fallthru
      _
    // Predicated region
    $region54: #{tpu_custom_call.1} parent=1 // pred_check
      _
    $region55: #{tpu_custom_call.1} parent=1 // pred_check_branch
      %191 = sbr.rel (0) target = $region57
    $region56: #{tpu_custom_call.1} parent=1 // pred_region
      %s193 = ssub.s32 256, 256
      %194 = vsyncadd [#allocation29], %s193
      %s195 = sshll.u32 [#allocation28], 4
      %s196 = int_to_ptr.vmem [resolvable:$true] %s195
      %201 = dma.hbm_to_vmem [thread:$0]  %s13, 256, %s196, [#allocation29], 64, 64, 4
    $region57: #{tpu_custom_call.1} parent=1 // pred_fallthru
      _
    // Predicated region
    $region58: #{tpu_custom_call.1} parent=1 // pred_check
      _
    $region59: #{tpu_custom_call.1} parent=1 // pred_check_branch
      %203 = sbr.rel (0) target = $region61
    $region60: #{tpu_custom_call.1} parent=1 // pred_region
      %s205 = ssub.s32 16, 16
      %206 = vsyncadd [#allocation29], %s205
      %s208 = sshll.u32 [#allocation30], 4
      %s209 = int_to_ptr.vmem [resolvable:$true] %s208
      %211 = dma.hbm_to_vmem [thread:$0]  %s14, 16, %s209, [#allocation29]
    $region61: #{tpu_custom_call.1} parent=1 // pred_fallthru
      _
    // Predicated region
    $region62: #{tpu_custom_call.1} parent=1 // pred_check
      _
    $region63: #{tpu_custom_call.1} parent=1 // pred_check_branch
      %213 = sbr.rel (0) target = $region65
    $region64: #{tpu_custom_call.1} parent=1 // pred_region
      %s215 = ssub.s32 16, 16
      %216 = vsyncadd [#allocation32], %s215
      %s218 = sshll.u32 [#allocation31], 4
      %s219 = int_to_ptr.vmem [resolvable:$true] %s218
      %221 = dma.hbm_to_vmem [thread:$0]  %s15, 16, %s219, [#allocation32]
    $region65: #{tpu_custom_call.1} parent=1 // pred_fallthru
      _
    // Predicated region
    $region66: #{tpu_custom_call.1} parent=1 // pred_check
      _
    $region67: #{tpu_custom_call.1} parent=1 // pred_check_branch
      %223 = sbr.rel (0) target = $region69
    $region68: #{tpu_custom_call.1} parent=1 // pred_region
      %s225 = ssub.s32 256, 256
      %226 = vsyncadd [#allocation32], %s225
      %s227 = sshll.u32 [#allocation33], 4
      %s228 = int_to_ptr.vmem [resolvable:$true] %s227
      %233 = dma.hbm_to_vmem [thread:$0]  %s16, 256, %s228, [#allocation32], 64, 64, 4
    $region69: #{tpu_custom_call.1} parent=1 // pred_fallthru
      _
    // Predicated region
    $region70: #{tpu_custom_call.1} parent=1 // pred_check
      _
    $region71: #{tpu_custom_call.1} parent=1 // pred_check_branch
      %235 = sbr.rel (0) target = $region73
    $region72: #{tpu_custom_call.1} parent=1 // pred_region
      %s237 = ssub.s32 256, 256
      %238 = vsyncadd [#allocation35], %s237
      %s239 = sshll.u32 [#allocation34], 4
      %s240 = int_to_ptr.vmem [resolvable:$true] %s239
      %245 = dma.hbm_to_vmem [thread:$0]  %s17, 256, %s240, [#allocation35], 64, 64, 4
    $region73: #{tpu_custom_call.1} parent=1 // pred_fallthru
      _
    // Predicated region
    $region74: #{tpu_custom_call.1} parent=1 // pred_check
      _
    $region75: #{tpu_custom_call.1} parent=1 // pred_check_branch
      %247 = sbr.rel (0) target = $region77
    $region76: #{tpu_custom_call.1} parent=1 // pred_region
      %s249 = ssub.s32 128, 128
      %250 = vsyncadd [#allocation35], %s249
      %s251 = sshll.u32 [#allocation36], 4
      %s252 = int_to_ptr.vmem [resolvable:$true] %s251
      %257 = dma.hbm_to_vmem [thread:$0]  %s18, 128, %s252, [#allocation35], 64, 64, 4
    $region77: #{tpu_custom_call.1} parent=1 // pred_fallthru
      _
    // Predicated region
    $region78: #{tpu_custom_call.1} parent=1 // pred_check
      _
    $region79: #{tpu_custom_call.1} parent=1 // pred_check_branch
      %259 = sbr.rel (0) target = $region81
    $region80: #{tpu_custom_call.1} parent=1 // pred_region
      %s261 = ssub.s32 16, 16
      %262 = vsyncadd [#allocation38], %s261
      %s264 = sshll.u32 [#allocation37], 4
      %s265 = int_to_ptr.vmem [resolvable:$true] %s264
      %267 = dma.hbm_to_vmem [thread:$0]  %s19, 16, %s265, [#allocation38]
    $region81: #{tpu_custom_call.1} parent=1 // pred_fallthru
      _
    // Predicated region
    $region82: #{tpu_custom_call.1} parent=1 // pred_check
      _
    $region83: #{tpu_custom_call.1} parent=1 // pred_check_branch
      %269 = sbr.rel (0) target = $region85
    $region84: #{tpu_custom_call.1} parent=1 // pred_region
      %270 = dma.done [#allocation8], 128
    $region85: #{tpu_custom_call.1} parent=1 // pred_fallthru
      _
    // Predicated region
    $region86: #{tpu_custom_call.1} parent=1 // pred_check
      _
    $region87: #{tpu_custom_call.1} parent=1 // pred_check_branch
      %272 = sbr.rel (0) target = $region89
    $region88: #{tpu_custom_call.1} parent=1 // pred_region
      %273 = dma.done [#allocation11], 128
    $region89: #{tpu_custom_call.1} parent=1 // pred_fallthru
      _
    // Predicated region
    $region90: #{tpu_custom_call.1} parent=1 // pred_check
      _
    $region91: #{tpu_custom_call.1} parent=1 // pred_check_branch
      %275 = sbr.rel (0) target = $region93
    $region92: #{tpu_custom_call.1} parent=1 // pred_region
      %276 = dma.done [#allocation11], 192
    $region93: #{tpu_custom_call.1} parent=1 // pred_fallthru
      _
    // Predicated region
    $region94: #{tpu_custom_call.1} parent=1 // pred_check
      _
    $region95: #{tpu_custom_call.1} parent=1 // pred_check_branch
      %278 = sbr.rel (0) target = $region97
    $region96: #{tpu_custom_call.1} parent=1 // pred_region
      %279 = dma.done [#allocation14], 128
    $region97: #{tpu_custom_call.1} parent=1 // pred_fallthru
      _
    // Predicated region
    $region98: #{tpu_custom_call.1} parent=1 // pred_check
      _
    $region99: #{tpu_custom_call.1} parent=1 // pred_check_branch
      %281 = sbr.rel (0) target = $region101
    $region100: #{tpu_custom_call.1} parent=1 // pred_region
      %282 = dma.done [#allocation14], 256
    $region101: #{tpu_custom_call.1} parent=1 // pred_fallthru
      _
    // Predicated region
    $region102: #{tpu_custom_call.1} parent=1 // pred_check
      _
    $region103: #{tpu_custom_call.1} parent=1 // pred_check_branch
      %284 = sbr.rel (0) target = $region105
    $region104: #{tpu_custom_call.1} parent=1 // pred_region
      %285 = dma.done [#allocation17], 16
    $region105: #{tpu_custom_call.1} parent=1 // pred_fallthru
      _
    // Predicated region
    $region106: #{tpu_custom_call.1} parent=1 // pred_check
      _
    $region107: #{tpu_custom_call.1} parent=1 // pred_check_branch
      %287 = sbr.rel (0) target = $region109
    $region108: #{tpu_custom_call.1} parent=1 // pred_region
      %288 = dma.done [#allocation17], 16
    $region109: #{tpu_custom_call.1} parent=1 // pred_fallthru
      _
    // Predicated region
    $region110: #{tpu_custom_call.1} parent=1 // pred_check
      _
    $region111: #{tpu_custom_call.1} parent=1 // pred_check_branch
      %290 = sbr.rel (0) target = $region113
    $region112: #{tpu_custom_call.1} parent=1 // pred_region
      %291 = dma.done [#allocation20], 256
    $region113: #{tpu_custom_call.1} parent=1 // pred_fallthru
      _
    // Predicated region
    $region114: #{tpu_custom_call.1} parent=1 // pred_check
      _
    $region115: #{tpu_custom_call.1} parent=1 // pred_check_branch
      %293 = sbr.rel (0) target = $region117
    $region116: #{tpu_custom_call.1} parent=1 // pred_region
      %294 = dma.done [#allocation20], 256
    $region117: #{tpu_custom_call.1} parent=1 // pred_fallthru
      _
    // Predicated region
    $region118: #{tpu_custom_call.1} parent=1 // pred_check
      _
    $region119: #{tpu_custom_call.1} parent=1 // pred_check_branch
      %296 = sbr.rel (0) target = $region121
    $region120: #{tpu_custom_call.1} parent=1 // pred_region
      %297 = dma.done [#allocation23], 16
    $region121: #{tpu_custom_call.1} parent=1 // pred_fallthru
      _
    // Predicated region
    $region122: #{tpu_custom_call.1} parent=1 // pred_check
      _
    $region123: #{tpu_custom_call.1} parent=1 // pred_check_branch
      %299 = sbr.rel (0) target = $region125
    $region124: #{tpu_custom_call.1} parent=1 // pred_region
      %300 = dma.done [#allocation23], 192
    $region125: #{tpu_custom_call.1} parent=1 // pred_fallthru
      _
    // Predicated region
    $region126: #{tpu_custom_call.1} parent=1 // pred_check
      _
    $region127: #{tpu_custom_call.1} parent=1 // pred_check_branch
      %302 = sbr.rel (0) target = $region129
    $region128: #{tpu_custom_call.1} parent=1 // pred_region
      %303 = dma.done [#allocation26], 128
    $region129: #{tpu_custom_call.1} parent=1 // pred_fallthru
      _
    // Predicated region
    $region130: #{tpu_custom_call.1} parent=1 // pred_check
      _
    $region131: #{tpu_custom_call.1} parent=1 // pred_check_branch
      %305 = sbr.rel (0) target = $region133
    $region132: #{tpu_custom_call.1} parent=1 // pred_region
      %306 = dma.done [#allocation26], 256
    $region133: #{tpu_custom_call.1} parent=1 // pred_fallthru
      _
    // Predicated region
    $region134: #{tpu_custom_call.1} parent=1 // pred_check
      _
    $region135: #{tpu_custom_call.1} parent=1 // pred_check_branch
      %308 = sbr.rel (0) target = $region137
    $region136: #{tpu_custom_call.1} parent=1 // pred_region
      %309 = dma.done [#allocation29], 256
    $region137: #{tpu_custom_call.1} parent=1 // pred_fallthru
      _
    // Predicated region
    $region138: #{tpu_custom_call.1} parent=1 // pred_check
      _
    $region139: #{tpu_custom_call.1} parent=1 // pred_check_branch
      %311 = sbr.rel (0) target = $region141
    $region140: #{tpu_custom_call.1} parent=1 // pred_region
      %312 = dma.done [#allocation29], 16
    $region141: #{tpu_custom_call.1} parent=1 // pred_fallthru
      _
    // Predicated region
    $region142: #{tpu_custom_call.1} parent=1 // pred_check
      _
    $region143: #{tpu_custom_call.1} parent=1 // pred_check_branch
      %314 = sbr.rel (0) target = $region145
    $region144: #{tpu_custom_call.1} parent=1 // pred_region
      %315 = dma.done [#allocation32], 16
    $region145: #{tpu_custom_call.1} parent=1 // pred_fallthru
      _
    // Predicated region
    $region146: #{tpu_custom_call.1} parent=1 // pred_check
      _
    $region147: #{tpu_custom_call.1} parent=1 // pred_check_branch
      %317 = sbr.rel (0) target = $region149
    $region148: #{tpu_custom_call.1} parent=1 // pred_region
      %318 = dma.done [#allocation32], 256
    $region149: #{tpu_custom_call.1} parent=1 // pred_fallthru
      _
    // Predicated region
    $region150: #{tpu_custom_call.1} parent=1 // pred_check
      _
    $region151: #{tpu_custom_call.1} parent=1 // pred_check_branch
      %320 = sbr.rel (0) target = $region153
    $region152: #{tpu_custom_call.1} parent=1 // pred_region
      %321 = dma.done [#allocation35], 256
    $region153: #{tpu_custom_call.1} parent=1 // pred_fallthru
      _
    // Predicated region
    $region154: #{tpu_custom_call.1} parent=1 // pred_check
      _
    $region155: #{tpu_custom_call.1} parent=1 // pred_check_branch
      %323 = sbr.rel (0) target = $region157
    $region156: #{tpu_custom_call.1} parent=1 // pred_region
      %324 = dma.done [#allocation35], 128
    $region157: #{tpu_custom_call.1} parent=1 // pred_fallthru
      _
    // Predicated region
    $region158: #{tpu_custom_call.1} parent=1 // pred_check
      _
    $region159: #{tpu_custom_call.1} parent=1 // pred_check_branch
      %326 = sbr.rel (0) target = $region161
    $region160: #{tpu_custom_call.1} parent=1 // pred_region
      %327 = dma.done [#allocation38], 16
    $region161: #{tpu_custom_call.1} parent=1 // pred_fallthru
      _
    %v329 = vld [vmem:[#allocation7] sm:$0xf]
    %v330 = vld [vmem:[#allocation7 + $0x4] sm:$0xf]
    %v331 = vld [vmem:[#allocation12] sm:$0xf]
    %v332 = vld [vmem:[#allocation12 + $0x4] sm:$0xf]
    %v333 = vld [vmem:[#allocation12 + $0x8] sm:$0x3]
    %v336 = vunpack.c.l.b16 %v329
    %v337 = vunpack.c.l.b16 %v330
    %v338 = vpack.c.b16 %v337, %v336
    %v342 = vunpack.c.l.b16 %v331
    %v343 = vunpack.c.l.b16 %v332
    %v344 = vunpack.c.l.b16 %v333
    %v345 = vpack.c.b16 %v343, %v342
    %v346 = vpack.c.b16 %v344, %v344
    %vm348 = vcmask 162816
    %v350 = vsel %vm348, %v338, 0
    %vm352 = vcmask 1041408
    %v354 = vsel %vm352, %v346, 0
    %356 = vmatprep.subr.bf16.mxu0 0
    %357 = vmatpush1.bf16.msra.mxu0 %v345
    %358 = vmatprep.subr.bf16.mxu0 0
    %359 = vmatpush1.bf16.msra.mxu0 %v354
    %360 = vmatprep.subr.bf16.mxu0 0
    %361 = vmatpush1.bf16.msra.mxu0 0
    %362 = vmatprep.subr.bf16.mxu0 0
    %363 = vmatpush1.bf16.msra.mxu0 0
    %364 = vmatprep.subr.bf16.mxu0 0
    %365 = vmatpush1.bf16.msra.mxu0 0
    %366 = vmatprep.subr.bf16.mxu0 0
    %367 = vmatpush1.bf16.msra.mxu0 0
    %368 = vmatprep.subr.bf16.mxu0 0
    %369 = vmatpush1.bf16.msra.mxu0 0
    %370 = vmatprep.subr.bf16.mxu0 0
    %371 = vmatpush1.bf16.msra.mxu0 0
    %372 = vmatprep.subr.bf16.mxu0 0
    %373 = vmatpush1.bf16.msra.mxu0 0
    %374 = vmatprep.subr.bf16.mxu0 0
    %375 = vmatpush1.bf16.msra.mxu0 0
    %376 = vmatprep.subr.bf16.mxu0 0
    %377 = vmatpush1.bf16.msra.mxu0 0
    %378 = vmatprep.subr.bf16.mxu0 0
    %379 = vmatpush1.bf16.msra.mxu0 0
    %380 = vmatprep.subr.bf16.mxu0 0
    %381 = vmatpush1.bf16.msra.mxu0 0
    %382 = vmatprep.subr.bf16.mxu0 0
    %383 = vmatpush1.bf16.msra.mxu0 0
    %384 = vmatprep.subr.bf16.mxu0 0
    %385 = vmatpush1.bf16.msra.mxu0 0
    %386 = vmatprep.subr.bf16.mxu0 0
    %387 = vmatpush1.bf16.msra.mxu0 0
    %388 = vmatprep.mubr.bf16.mxu0 0
    %389 = vmatmul.mubr.bf16.gmra.mrb[0].mxu0 %v350
    %v390 = vpop.f32.mrb[0].mxu0
    %v391 = vadd.f32 0.0, %v390
    %v392 = vpop.f32.mrb[0].mxu0
    %v393 = vpop.f32.mrb[0].mxu0
    %v394 = vadd.f32 0.0, %v393
    %v395 = vpop.f32.mrb[0].mxu0
    %396 = vdwg.mxu0
    %v397 = vld [vmem:[#allocation13] sm:$0xf]
    %v398 = vld [vmem:[#allocation13 + $0x4] sm:$0xf]
    %v399 = vpack.c.bf16 %v394, %v391
    %v400 = vld [vmem:[#allocation16] sm:$0x1]
    %v402 = vlaneseq
    %v403 = vshrl.u32 %v402, 7
    %v404 = vsub.s32 0, %v403
    %v405 = vrot.slane %v400, %v404
    %v409 = vunpack.c.l.b16 %v397
    %v410 = vunpack.c.l.b16 %v398
    %v411 = vpack.c.b16 %v410, %v409
    %vm413 = vcmask 130048
    %v415 = vsel %vm413, %v399, 0
    %417 = vmatprep.subr.bf16.mxu0 0
    %418 = vmatpush1.bf16.msra.mxu0 %v411
    %419 = vmatprep.subr.bf16.mxu0 0
    %420 = vmatpush1.bf16.msra.mxu0 0
    %421 = vmatprep.subr.bf16.mxu0 0
    %422 = vmatpush1.bf16.msra.mxu0 0
    %423 = vmatprep.subr.bf16.mxu0 0
    %424 = vmatpush1.bf16.msra.mxu0 0
    %425 = vmatprep.subr.bf16.mxu0 0
    %426 = vmatpush1.bf16.msra.mxu0 0
    %427 = vmatprep.subr.bf16.mxu0 0
    %428 = vmatpush1.bf16.msra.mxu0 0
    %429 = vmatprep.subr.bf16.mxu0 0
    %430 = vmatpush1.bf16.msra.mxu0 0
    %431 = vmatprep.subr.bf16.mxu0 0
    %432 = vmatpush1.bf16.msra.mxu0 0
    %433 = vmatprep.subr.bf16.mxu0 0
    %434 = vmatpush1.bf16.msra.mxu0 0
    %435 = vmatprep.subr.bf16.mxu0 0
    %436 = vmatpush1.bf16.msra.mxu0 0
    %437 = vmatprep.subr.bf16.mxu0 0
    %438 = vmatpush1.bf16.msra.mxu0 0
    %439 = vmatprep.subr.bf16.mxu0 0
    %440 = vmatpush1.bf16.msra.mxu0 0
    %441 = vmatprep.subr.bf16.mxu0 0
    %442 = vmatpush1.bf16.msra.mxu0 0
    %443 = vmatprep.subr.bf16.mxu0 0
    %444 = vmatpush1.bf16.msra.mxu0 0
    %445 = vmatprep.subr.bf16.mxu0 0
    %446 = vmatpush1.bf16.msra.mxu0 0
    %447 = vmatprep.subr.bf16.mxu0 0
    %448 = vmatpush1.bf16.msra.mxu0 0
    %449 = vmatprep.mubr.bf16.mxu0 0
    %450 = vmatmul.mubr.bf16.gmra.mrb[0].mxu0 %v415
    %v451 = vpop.f32.mrb[0].mxu0
    %v452 = vadd.f32 %v405, %v451
    %v453 = vpop.f32.mrb[0].mxu0
    %v454 = vpop.f32.mrb[0].mxu0
    %v455 = vadd.f32 %v405, %v454
    %v456 = vpop.f32.mrb[0].mxu0
    %457 = vdwg.mxu0
    %v460 = vcombine.high %v452, %v452
    %v462 = vunpack.c.l.s4 1983009808
    %v463 = vunpack.c.0.s8 %v462
    %v464 = vlaneseq
    %v465 = vshrl.u32 %v464, 7
    %v466 = vsub.s32 %v463, %v465
    %v467 = vrot.slane %v452, %v466
    %v469 = vunpack.c.l.s4 1983009808
    %v470 = vunpack.c.0.s8 %v469
    %v471 = vlaneseq
    %v472 = vshrl.u32 %v471, 7
    %v473 = vsub.s32 %v470, %v472
    %v474 = vrot.slane %v460, %v473
    %v475 = vcombine.high %v467, %v467
    %v476 = vcombine.high %v474, %v474
    %v477 = vcombine.high %v455, %v455
    %v479 = vunpack.c.l.s4 1983009808
    %v480 = vunpack.c.0.s8 %v479
    %v481 = vlaneseq
    %v482 = vshrl.u32 %v481, 7
    %v483 = vsub.s32 %v480, %v482
    %v484 = vrot.slane %v455, %v483
    %v486 = vunpack.c.l.s4 1983009808
    %v487 = vunpack.c.0.s8 %v486
    %v488 = vlaneseq
    %v489 = vshrl.u32 %v488, 7
    %v490 = vsub.s32 %v487, %v489
    %v491 = vrot.slane %v477, %v490
    %v492 = vcombine.high %v484, %v484
    %v493 = vcombine.high %v491, %v491
    %vm502 = vcmask 779264
    %503 = vst.msk [vmem:[#allocation3] sm:$0x3] %vm502, %v467
    %504 = vst.msk [vmem:[#allocation3 + $0x2] sm:$0x3] %vm502, %v475
    %505 = vst.msk [vmem:[#allocation3 + $0x4] sm:$0x3] %vm502, %v474
    %506 = vst.msk [vmem:[#allocation3 + $0x6] sm:$0x3] %vm502, %v476
    %507 = vst.msk [vmem:[#allocation3 + $0x8] sm:$0x3] %vm502, %v484
    %508 = vst.msk [vmem:[#allocation3 + $0xa] sm:$0x3] %vm502, %v492
    %509 = vst.msk [vmem:[#allocation3 + $0xc] sm:$0x3] %vm502, %v491
    %510 = vst.msk [vmem:[#allocation3 + $0xe] sm:$0x3] %vm502, %v493
    %v511 = vld [vmem:[#allocation10] sm:$0xf]
    %v512 = vld [vmem:[#allocation10 + $0x4] sm:$0x1]
    %v513 = vld [vmem:[#allocation24] sm:$0xf]
    %v514 = vld [vmem:[#allocation24 + $0x4] sm:$0xf]
    %v515 = vld [vmem:[#allocation24 + $0x8] sm:$0xf]
    %v518 = vunpack.c.l.b16 %v511
    %v519 = vunpack.c.l.b16 %v512
    %v520 = vpack.c.b16 %v519, %v518
    %v524 = vunpack.c.l.b16 %v513
    %v525 = vunpack.c.l.b16 %v514
    %v526 = vunpack.c.l.b16 %v515
    %v527 = vpack.c.b16 %v525, %v524
    %v528 = vpack.c.b16 %v526, %v526
    %vm530 = vcmask 195584
    %v532 = vsel %vm530, %v520, 0
    %vm534 = vcmask 1043456
    %v536 = vsel %vm534, %v528, 0
    %538 = vmatprep.subr.bf16.mxu0 0
    %539 = vmatpush1.bf16.msra.mxu0 %v527
    %540 = vmatprep.subr.bf16.mxu0 0
    %541 = vmatpush1.bf16.msra.mxu0 %v536
    %542 = vmatprep.subr.bf16.mxu0 0
    %543 = vmatpush1.bf16.msra.mxu0 0
    %544 = vmatprep.subr.bf16.mxu0 0
    %545 = vmatpush1.bf16.msra.mxu0 0
    %546 = vmatprep.subr.bf16.mxu0 0
    %547 = vmatpush1.bf16.msra.mxu0 0
    %548 = vmatprep.subr.bf16.mxu0 0
    %549 = vmatpush1.bf16.msra.mxu0 0
    %550 = vmatprep.subr.bf16.mxu0 0
    %551 = vmatpush1.bf16.msra.mxu0 0
    %552 = vmatprep.subr.bf16.mxu0 0
    %553 = vmatpush1.bf16.msra.mxu0 0
    %554 = vmatprep.subr.bf16.mxu0 0
    %555 = vmatpush1.bf16.msra.mxu0 0
    %556 = vmatprep.subr.bf16.mxu0 0
    %557 = vmatpush1.bf16.msra.mxu0 0
    %558 = vmatprep.subr.bf16.mxu0 0
    %559 = vmatpush1.bf16.msra.mxu0 0
    %560 = vmatprep.subr.bf16.mxu0 0
    %561 = vmatpush1.bf16.msra.mxu0 0
    %562 = vmatprep.subr.bf16.mxu0 0
    %563 = vmatpush1.bf16.msra.mxu0 0
    %564 = vmatprep.subr.bf16.mxu0 0
    %565 = vmatpush1.bf16.msra.mxu0 0
    %566 = vmatprep.subr.bf16.mxu0 0
    %567 = vmatpush1.bf16.msra.mxu0 0
    %568 = vmatprep.subr.bf16.mxu0 0
    %569 = vmatpush1.bf16.msra.mxu0 0
    %570 = vmatprep.mubr.bf16.mxu0 0
    %571 = vmatmul.mubr.bf16.gmra.mrb[0].mxu0 %v532
    %v572 = vpop.f32.mrb[0].mxu0
    %v573 = vadd.f32 0.0, %v572
    %v574 = vpop.f32.mrb[0].mxu0
    %v575 = vpop.f32.mrb[0].mxu0
    %v576 = vadd.f32 0.0, %v575
    %v577 = vpop.f32.mrb[0].mxu0
    %578 = vdwg.mxu0
    %v579 = vld [vmem:[#allocation25] sm:$0xf]
    %v580 = vld [vmem:[#allocation25 + $0x4] sm:$0xf]
    %v581 = vpack.c.bf16 %v576, %v573
    %v582 = vld [vmem:[#allocation30] sm:$0x1]
    %v584 = vlaneseq
    %v585 = vshrl.u32 %v584, 7
    %v586 = vsub.s32 0, %v585
    %v587 = vrot.slane %v582, %v586
    %v591 = vunpack.c.l.b16 %v579
    %v592 = vunpack.c.l.b16 %v580
    %v593 = vpack.c.b16 %v592, %v591
    %v596 = vsel %vm413, %v581, 0
    %598 = vmatprep.subr.bf16.mxu0 0
    %599 = vmatpush1.bf16.msra.mxu0 %v593
    %600 = vmatprep.subr.bf16.mxu0 0
    %601 = vmatpush1.bf16.msra.mxu0 0
    %602 = vmatprep.subr.bf16.mxu0 0
    %603 = vmatpush1.bf16.msra.mxu0 0
    %604 = vmatprep.subr.bf16.mxu0 0
    %605 = vmatpush1.bf16.msra.mxu0 0
    %606 = vmatprep.subr.bf16.mxu0 0
    %607 = vmatpush1.bf16.msra.mxu0 0
    %608 = vmatprep.subr.bf16.mxu0 0
    %609 = vmatpush1.bf16.msra.mxu0 0
    %610 = vmatprep.subr.bf16.mxu0 0
    %611 = vmatpush1.bf16.msra.mxu0 0
    %612 = vmatprep.subr.bf16.mxu0 0
    %613 = vmatpush1.bf16.msra.mxu0 0
    %614 = vmatprep.subr.bf16.mxu0 0
    %615 = vmatpush1.bf16.msra.mxu0 0
    %616 = vmatprep.subr.bf16.mxu0 0
    %617 = vmatpush1.bf16.msra.mxu0 0
    %618 = vmatprep.subr.bf16.mxu0 0
    %619 = vmatpush1.bf16.msra.mxu0 0
    %620 = vmatprep.subr.bf16.mxu0 0
    %621 = vmatpush1.bf16.msra.mxu0 0
    %622 = vmatprep.subr.bf16.mxu0 0
    %623 = vmatpush1.bf16.msra.mxu0 0
    %624 = vmatprep.subr.bf16.mxu0 0
    %625 = vmatpush1.bf16.msra.mxu0 0
    %626 = vmatprep.subr.bf16.mxu0 0
    %627 = vmatpush1.bf16.msra.mxu0 0
    %628 = vmatprep.subr.bf16.mxu0 0
    %629 = vmatpush1.bf16.msra.mxu0 0
    %630 = vmatprep.mubr.bf16.mxu0 0
    %631 = vmatmul.mubr.bf16.gmra.mrb[0].mxu0 %v596
    %v632 = vpop.f32.mrb[0].mxu0
    %v633 = vadd.f32 %v587, %v632
    %v634 = vpop.f32.mrb[0].mxu0
    %v635 = vpop.f32.mrb[0].mxu0
    %v636 = vadd.f32 %v587, %v635
    %v637 = vpop.f32.mrb[0].mxu0
    %638 = vdwg.mxu0
    %v641 = vcombine.high %v633, %v633
    %v643 = vunpack.c.l.s4 1983009808
    %v644 = vunpack.c.0.s8 %v643
    %v645 = vlaneseq
    %v646 = vshrl.u32 %v645, 7
    %v647 = vsub.s32 %v644, %v646
    %v648 = vrot.slane %v633, %v647
    %v650 = vunpack.c.l.s4 1983009808
    %v651 = vunpack.c.0.s8 %v650
    %v652 = vlaneseq
    %v653 = vshrl.u32 %v652, 7
    %v654 = vsub.s32 %v651, %v653
    %v655 = vrot.slane %v641, %v654
    %v656 = vcombine.high %v648, %v648
    %v657 = vcombine.high %v655, %v655
    %v659 = vunpack.c.l.s4 1983009808
    %v660 = vunpack.c.0.s8 %v659
    %v661 = vlaneseq
    %v662 = vshrl.u32 %v661, 7
    %v663 = vsub.s32 %v660, %v662
    %v664 = vrot.slane %v636, %v663
    %670 = vst.msk [vmem:[#allocation4] sm:$0x3] %vm502, %v648
    %671 = vst.msk [vmem:[#allocation4 + $0x2] sm:$0x3] %vm502, %v656
    %672 = vst.msk [vmem:[#allocation4 + $0x4] sm:$0x3] %vm502, %v655
    %673 = vst.msk [vmem:[#allocation4 + $0x6] sm:$0x3] %vm502, %v657
    %674 = vst.msk [vmem:[#allocation4 + $0x8] sm:$0x3] %vm502, %v664
    %v675 = vld [vmem:[#allocation15] sm:$0xf]
    %v676 = vld [vmem:[#allocation15 + $0x4] sm:$0xf]
    %v677 = vld [vmem:[#allocation15 + $0x8] sm:$0xf]
    %v678 = vld [vmem:[#allocation15 + $0xc] sm:$0xf]
    %v679 = vld [vmem:[#allocation18] sm:$0x1]
    loop: start=0, step=1, limit=8
    $region162: #{tpu_custom_call.1} parent=1 // loop_pre_header
      _
    $region163: #{tpu_custom_call.1} parent=1 // loop_header
      %s681 = sphi 0, %s685
      %p682 = scmp.ge.s32.totalorder %s681, 8
      %v686 = vphi 0.0, %v781
    $region164: #{tpu_custom_call.1} parent=1 // loop_header_branch
      %684 = sbr.rel (%p682) target = $region168
    $region165: #{tpu_custom_call.1} parent=1 // loop_body
      %v687 = vpack.c.bf16 %v686, %v686
      %v689 = vlaneseq
      %v690 = vshrl.u32 %v689, 7
      %v691 = vsub.s32 0, %v690
      %v692 = vrot.slane %v679, %v691
      %695 = vrot.lane.b32.xlu0 %v687, 96
      %v696 = vpop.permute.xlu0 %695
      %v701 = vunpack.c.l.b16 %v675
      %v702 = vunpack.c.l.b16 %v676
      %v703 = vunpack.c.l.b16 %v677
      %v704 = vunpack.c.l.b16 %v678
      %v705 = vpack.c.b16 %v702, %v701
      %v706 = vpack.c.b16 %v704, %v703
      %vm709 = vcmask 261120
      %v711 = vsel %vm709, %v696, 0
      %713 = vmatprep.subr.bf16.mxu0 0
      %714 = vmatpush1.bf16.msra.mxu0 %v705
      %715 = vmatprep.subr.bf16.mxu0 0
      %716 = vmatpush1.bf16.msra.mxu0 %v706
      %717 = vmatprep.subr.bf16.mxu0 0
      %718 = vmatpush1.bf16.msra.mxu0 0
      %719 = vmatprep.subr.bf16.mxu0 0
      %720 = vmatpush1.bf16.msra.mxu0 0
      %721 = vmatprep.subr.bf16.mxu0 0
      %722 = vmatpush1.bf16.msra.mxu0 0
      %723 = vmatprep.subr.bf16.mxu0 0
      %724 = vmatpush1.bf16.msra.mxu0 0
      %725 = vmatprep.subr.bf16.mxu0 0
      %726 = vmatpush1.bf16.msra.mxu0 0
      %727 = vmatprep.subr.bf16.mxu0 0
      %728 = vmatpush1.bf16.msra.mxu0 0
      %729 = vmatprep.subr.bf16.mxu0 0
      %730 = vmatpush1.bf16.msra.mxu0 0
      %731 = vmatprep.subr.bf16.mxu0 0
      %732 = vmatpush1.bf16.msra.mxu0 0
      %733 = vmatprep.subr.bf16.mxu0 0
      %734 = vmatpush1.bf16.msra.mxu0 0
      %735 = vmatprep.subr.bf16.mxu0 0
      %736 = vmatpush1.bf16.msra.mxu0 0
      %737 = vmatprep.subr.bf16.mxu0 0
      %738 = vmatpush1.bf16.msra.mxu0 0
      %739 = vmatprep.subr.bf16.mxu0 0
      %740 = vmatpush1.bf16.msra.mxu0 0
      %741 = vmatprep.subr.bf16.mxu0 0
      %742 = vmatpush1.bf16.msra.mxu0 0
      %743 = vmatprep.subr.bf16.mxu0 0
      %744 = vmatpush1.bf16.msra.mxu0 0
      %745 = vmatprep.mubr.bf16.mxu0 0
      %746 = vmatmul.mubr.bf16.gmra.mrb[0].mxu0 %v711
      %v747 = vpop.f32.mrb[0].mxu0
      %v748 = vadd.f32 %v692, %v747
      %v749 = vpop.f32.mrb[0].mxu0
      %v750 = vpop.f32.mrb[0].mxu0
      %v751 = vpop.f32.mrb[0].mxu0
      %752 = vdwg.mxu0
      %s753 = smul.u32 %s681, 2
      %s754 = scalar_lea.vmem [#allocation3], %s753
      %v755 = vld [vmem:[%s754] sm:$0x3]
      %v756 = vadd.f32 %v755, %v748
      %v757 = vxor.u32 %v756, 2147483648
      %v758 = vmul.f32 %v757, 1.442695
      %v759 = vpow.pop %v758
      %v760 = vadd.f32 %v759, 1.0
      %v761 = vrcp.pop %v760
      %v762 = vmul.f32 1.0, %v761
      %764 = vrot.lane.b32.xlu0 %v748, 64
      %v765 = vpop.permute.xlu0 %764
      %v767 = vmul.f32 %v762, %v765
      %769 = vrot.lane.b32.xlu0 %v767, 64
      %v770 = vpop.permute.xlu0 %769
      %v772 = vadd.f32 %v755, %v770
      %v773 = vtanh.pop %v772
      %v774 = vsub.f32 1.0, %v762
      %776 = vrot.lane.b32.xlu0 %v773, 96
      %v777 = vpop.permute.xlu0 %776
      %v779 = vmul.f32 %v774, %v777
      %v780 = vmul.f32 %v762, %v686
      %v781 = vadd.f32 %v779, %v780
      %783 = vrot.lane.b32.xlu0 %v781, 96
      %v784 = vpop.permute.xlu0 %783
      %s786 = scalar_lea.vmem [#allocation2], %s753
      %vm787 = vcmask 254976
      %788 = vst.msk [vmem:[%s786] sm:$0x3] %vm787, %v784
    $region166: #{tpu_custom_call.1} parent=1 // loop_footer
      %s685 = sadd.s32 1, %s681
    $region167: #{tpu_custom_call.1} parent=1 // loop_footer_branch
      %680 = sbr.rel target = $region163
    $region168: #{tpu_custom_call.1} parent=1 // loop_exit
      _
    %v789 = vld [vmem:[#allocation2] sm:$0x3]
    %v790 = vld [vmem:[#allocation2 + $0x2] sm:$0x3]
    %v791 = vld [vmem:[#allocation2 + $0x4] sm:$0x3]
    %v792 = vld [vmem:[#allocation2 + $0x6] sm:$0x3]
    %v793 = vld [vmem:[#allocation2 + $0x8] sm:$0x3]
    %v794 = vld [vmem:[#allocation2 + $0xa] sm:$0x3]
    %v795 = vld [vmem:[#allocation2 + $0xc] sm:$0x3]
    %v796 = vld [vmem:[#allocation2 + $0xe] sm:$0x3]
    %v797 = vcombine.low %v789, %v791
    %v799 = vunpack.c.l.s4 1983009808
    %v800 = vunpack.c.0.s8 %v799
    %v801 = vlaneseq
    %v802 = vshrl.u32 %v801, 7
    %v803 = vsub.s32 %v800, %v802
    %v804 = vrot.slane %v797, %v803
    %v805 = vcombine.low %v790, %v792
    %v807 = vunpack.c.l.s4 1983009808
    %v808 = vunpack.c.0.s8 %v807
    %v809 = vlaneseq
    %v810 = vshrl.u32 %v809, 7
    %v811 = vsub.s32 %v808, %v810
    %v812 = vrot.slane %v805, %v811
    %v813 = vcombine.low %v793, %v795
    %v815 = vunpack.c.l.s4 1983009808
    %v816 = vunpack.c.0.s8 %v815
    %v817 = vlaneseq
    %v818 = vshrl.u32 %v817, 7
    %v819 = vsub.s32 %v816, %v818
    %v820 = vrot.slane %v813, %v819
    %v821 = vcombine.low %v794, %v796
    %v823 = vunpack.c.l.s4 1983009808
    %v824 = vunpack.c.0.s8 %v823
    %v825 = vlaneseq
    %v826 = vshrl.u32 %v825, 7
    %v827 = vsub.s32 %v824, %v826
    %v828 = vrot.slane %v821, %v827
    %v829 = vcombine.low %v804, %v812
    %v831 = vunpack.c.l.s4 1934713408
    %v832 = vunpack.c.0.s8 %v831
    %v833 = vlaneseq
    %v834 = vshrl.u32 %v833, 7
    %v835 = vsub.s32 %v832, %v834
    %v836 = vrot.slane %v829, %v835
    %v837 = vcombine.low %v820, %v828
    %v839 = vunpack.c.l.s4 1934713408
    %v840 = vunpack.c.0.s8 %v839
    %v841 = vlaneseq
    %v842 = vshrl.u32 %v841, 7
    %v843 = vsub.s32 %v840, %v842
    %v844 = vrot.slane %v837, %v843
    %v845 = vcombine.low %v836, %v844
    %v846 = vcombine.high %v836, %v844
    %v847 = vld [vmem:[#allocation21] sm:$0xf]
    %v848 = vld [vmem:[#allocation21 + $0x4] sm:$0xf]
    %v849 = vld [vmem:[#allocation21 + $0x8] sm:$0xf]
    %v850 = vld [vmem:[#allocation21 + $0xc] sm:$0xf]
    %v851 = vpack.c.bf16 %v846, %v845
    %v856 = vunpack.c.l.b16 %v847
    %v857 = vunpack.c.l.b16 %v848
    %v858 = vunpack.c.l.b16 %v849
    %v859 = vunpack.c.l.b16 %v850
    %v860 = vpack.c.b16 %v857, %v856
    %v861 = vpack.c.b16 %v859, %v858
    %vm864 = vcmask 261120
    %v866 = vsel %vm864, %v851, 0
    %868 = vmatprep.subr.bf16.mxu0 0
    %869 = vmatpush1.bf16.msra.mxu0 %v860
    %870 = vmatprep.subr.bf16.mxu0 0
    %871 = vmatpush1.bf16.msra.mxu0 %v861
    %872 = vmatprep.subr.bf16.mxu0 0
    %873 = vmatpush1.bf16.msra.mxu0 0
    %874 = vmatprep.subr.bf16.mxu0 0
    %875 = vmatpush1.bf16.msra.mxu0 0
    %876 = vmatprep.subr.bf16.mxu0 0
    %877 = vmatpush1.bf16.msra.mxu0 0
    %878 = vmatprep.subr.bf16.mxu0 0
    %879 = vmatpush1.bf16.msra.mxu0 0
    %880 = vmatprep.subr.bf16.mxu0 0
    %881 = vmatpush1.bf16.msra.mxu0 0
    %882 = vmatprep.subr.bf16.mxu0 0
    %883 = vmatpush1.bf16.msra.mxu0 0
    %884 = vmatprep.subr.bf16.mxu0 0
    %885 = vmatpush1.bf16.msra.mxu0 0
    %886 = vmatprep.subr.bf16.mxu0 0
    %887 = vmatpush1.bf16.msra.mxu0 0
    %888 = vmatprep.subr.bf16.mxu0 0
    %889 = vmatpush1.bf16.msra.mxu0 0
    %890 = vmatprep.subr.bf16.mxu0 0
    %891 = vmatpush1.bf16.msra.mxu0 0
    %892 = vmatprep.subr.bf16.mxu0 0
    %893 = vmatpush1.bf16.msra.mxu0 0
    %894 = vmatprep.subr.bf16.mxu0 0
    %895 = vmatpush1.bf16.msra.mxu0 0
    %896 = vmatprep.subr.bf16.mxu0 0
    %897 = vmatpush1.bf16.msra.mxu0 0
    %898 = vmatprep.subr.bf16.mxu0 0
    %899 = vmatpush1.bf16.msra.mxu0 0
    %900 = vmatprep.mubr.bf16.mxu0 0
    %901 = vmatmul.mubr.bf16.gmra.mrb[0].mxu0 %v866
    %v902 = vpop.f32.mrb[0].mxu0
    %v903 = vadd.f32 0.0, %v902
    %v904 = vpop.f32.mrb[0].mxu0
    %v905 = vpop.f32.mrb[0].mxu0
    %v906 = vadd.f32 0.0, %v905
    %v907 = vpop.f32.mrb[0].mxu0
    %908 = vdwg.mxu0
    %v909 = vld [vmem:[#allocation19] sm:$0xf]
    %v910 = vld [vmem:[#allocation19 + $0x4] sm:$0xf]
    %v911 = vld [vmem:[#allocation19 + $0x8] sm:$0xf]
    %v912 = vld [vmem:[#allocation19 + $0xc] sm:$0xf]
    %v913 = vld [vmem:[#allocation22] sm:$0x1]
    %v914 = vld [vmem:[#allocation27] sm:$0xf]
    %v915 = vld [vmem:[#allocation27 + $0x4] sm:$0xf]
    %v916 = vld [vmem:[#allocation27 + $0x8] sm:$0xf]
    %v917 = vld [vmem:[#allocation27 + $0xc] sm:$0xf]
    %v918 = vld [vmem:[#allocation28] sm:$0xf]
    %v919 = vld [vmem:[#allocation28 + $0x4] sm:$0xf]
    %v920 = vld [vmem:[#allocation28 + $0x8] sm:$0xf]
    %v921 = vld [vmem:[#allocation28 + $0xc] sm:$0xf]
    %v922 = vld [vmem:[#allocation31] sm:$0x1]
    loop: start=0, step=1, limit=5
    $region169: #{tpu_custom_call.1} parent=1 // loop_pre_header
      _
    $region170: #{tpu_custom_call.1} parent=1 // loop_header
      %s924 = sphi 0, %s928
      %p925 = scmp.ge.s32.totalorder %s924, 5
      %v929 = vphi %v686, %v1287
    $region171: #{tpu_custom_call.1} parent=1 // loop_header_branch
      %927 = sbr.rel (%p925) target = $region175
    $region172: #{tpu_custom_call.1} parent=1 // loop_body
      %v930 = vpack.c.bf16 %v929, %v929
      %932 = vrot.lane.b32.xlu0 %v930, 96
      %v933 = vpop.permute.xlu0 %932
      %v938 = vunpack.c.l.b16 %v909
      %v939 = vunpack.c.l.b16 %v910
      %v940 = vunpack.c.l.b16 %v911
      %v941 = vunpack.c.l.b16 %v912
      %v942 = vpack.c.b16 %v939, %v938
      %v943 = vpack.c.b16 %v941, %v940
      %v947 = vsel %vm864, %v933, 0
      %949 = vmatprep.subr.bf16.mxu0 0
      %950 = vmatpush1.bf16.msra.mxu0 %v942
      %951 = vmatprep.subr.bf16.mxu0 0
      %952 = vmatpush1.bf16.msra.mxu0 %v943
      %953 = vmatprep.subr.bf16.mxu0 0
      %954 = vmatpush1.bf16.msra.mxu0 0
      %955 = vmatprep.subr.bf16.mxu0 0
      %956 = vmatpush1.bf16.msra.mxu0 0
      %957 = vmatprep.subr.bf16.mxu0 0
      %958 = vmatpush1.bf16.msra.mxu0 0
      %959 = vmatprep.subr.bf16.mxu0 0
      %960 = vmatpush1.bf16.msra.mxu0 0
      %961 = vmatprep.subr.bf16.mxu0 0
      %962 = vmatpush1.bf16.msra.mxu0 0
      %963 = vmatprep.subr.bf16.mxu0 0
      %964 = vmatpush1.bf16.msra.mxu0 0
      %965 = vmatprep.subr.bf16.mxu0 0
      %966 = vmatpush1.bf16.msra.mxu0 0
      %967 = vmatprep.subr.bf16.mxu0 0
      %968 = vmatpush1.bf16.msra.mxu0 0
      %969 = vmatprep.subr.bf16.mxu0 0
      %970 = vmatpush1.bf16.msra.mxu0 0
      %971 = vmatprep.subr.bf16.mxu0 0
      %972 = vmatpush1.bf16.msra.mxu0 0
      %973 = vmatprep.subr.bf16.mxu0 0
      %974 = vmatpush1.bf16.msra.mxu0 0
      %975 = vmatprep.subr.bf16.mxu0 0
      %976 = vmatpush1.bf16.msra.mxu0 0
      %977 = vmatprep.subr.bf16.mxu0 0
      %978 = vmatpush1.bf16.msra.mxu0 0
      %979 = vmatprep.subr.bf16.mxu0 0
      %980 = vmatpush1.bf16.msra.mxu0 0
      %981 = vmatprep.mubr.bf16.mxu0 0
      %982 = vmatmul.mubr.bf16.gmra.mrb[0].mxu0 %v947
      %v983 = vpop.f32.mrb[0].mxu0
      %v984 = vadd.f32 0.0, %v983
      %v985 = vpop.f32.mrb[0].mxu0
      %v986 = vpop.f32.mrb[0].mxu0
      %v987 = vpop.f32.mrb[0].mxu0
      %988 = vdwg.mxu0
      %v991 = vunpack.c.l.s4 1966171168
      %v992 = vunpack.c.0.s8 %v991
      %v993 = vlaneseq
      %v994 = vshrl.u32 %v993, 7
      %v995 = vsub.s32 %v992, %v994
      %v996 = vrot.slane %v984, %v995
      %v997 = vcombine.high %v996, %v996
      %v999 = vunpack.c.l.s4 1966171168
      %v1000 = vunpack.c.0.s8 %v999
      %v1001 = vlaneseq
      %v1002 = vshrl.u32 %v1001, 7
      %v1003 = vsub.s32 %v1000, %v1002
      %v1004 = vrot.slane %v996, %v1003
      %v1006 = vunpack.c.l.s4 1966171168
      %v1007 = vunpack.c.0.s8 %v1006
      %v1008 = vlaneseq
      %v1009 = vshrl.u32 %v1008, 7
      %v1010 = vsub.s32 %v1007, %v1009
      %v1011 = vrot.slane %v997, %v1010
      %v1012 = vlaneseq
      %v1013 = vshrl.u32 %v1012, 7
      %v1014 = vsub.s32 0, %v1013
      %v1015 = vrot.slane %v1004, %v1014
      %v1016 = vlaneseq
      %v1017 = vshrl.u32 %v1016, 7
      %v1018 = vsub.s32 0, %v1017
      %v1019 = vrot.slane %v1011, %v1018
      %v1022 = vadd.f32 %v903, %v1015
      %v1023 = vadd.f32 %v906, %v1019
      %v1024 = vtanh.pop %v1022
      %v1025 = vtanh.pop %v1023
      %v1027 = vlaneseq
      %v1028 = vshrl.u32 %v1027, 7
      %v1029 = vsub.s32 0, %v1028
      %v1030 = vrot.slane %v913, %v1029
      %v1032 = vmul.f32 %v1024, %v1030
      %v1033 = vmul.f32 %v1025, %v1030
      %v1034 = vsel %vm864, %v1032, 0.0
      %1035 = vadd.xlane.f32.xlu0 %v1034
      %v1036 = vpop.xlane.xlu0 %1035
      %v1037 = vsel %vm864, %v1033, 0.0
      %1038 = vadd.xlane.f32.xlu0 %v1037
      %v1039 = vpop.xlane.xlu0 %1038
      %v1042 = vlaneseq
      %v1043 = vand.u32 %v1042, 127
      %v1044 = vlaneseq
      %v1045 = vshrl.u32 %v1044, 7
      %v1046 = vsub.s32 %v1043, %v1045
      %v1047 = vrot.slane %v1036, %v1046
      %v1048 = vlaneseq
      %v1049 = vshrl.u32 %v1048, 7
      %v1050 = vsub.s32 %v1043, %v1049
      %v1051 = vrot.slane %v1039, %v1050
      %vm1052 = vcmask 1041409
      %v1053 = vsel %vm1052, %v1051, %v1047
      %vm1055 = vcmask 58368
      %v1056 = vsel %vm1055, %v1053, -inf
      %1057 = vmax.xlane.f32.xlu0 %v1056
      %v1058 = vpop.xlane.xlu0 %1057
      %v1060 = vlaneseq
      %v1061 = vshrl.u32 %v1060, 7
      %v1062 = vsub.s32 0, %v1061
      %v1063 = vrot.slane %v1058, %v1062
      %v1064 = vlaneseq
      %v1065 = vshrl.u32 %v1064, 7
      %v1066 = vsub.s32 1, %v1065
      %v1067 = vrot.slane %v1058, %v1066
      %v1070 = vsub.f32 %v1036, %v1063
      %v1071 = vsub.f32 %v1039, %v1067
      %v1072 = vmul.f32 %v1070, 1.442695
      %v1073 = vpow.pop %v1072
      %v1074 = vmul.f32 %v1071, 1.442695
      %v1075 = vpow.pop %v1074
      %1078 = vset.pattern.permute.xlu0 0
      %1079 = vperm.xlu0 %1078, %v1073
      %v1080 = vpop.permute.xlu0 %1079
      %1081 = vset.pattern.permute.xlu0 0
      %1082 = vperm.xlu0 %1081, %v1075
      %v1083 = vpop.permute.xlu0 %1082
      %v1084 = vlaneseq
      %v1085 = vshrl.u32 %v1084, 7
      %v1086 = vsub.s32 %v1043, %v1085
      %v1087 = vrot.slane %v1080, %v1086
      %v1088 = vlaneseq
      %v1089 = vshrl.u32 %v1088, 7
      %v1090 = vsub.s32 %v1043, %v1089
      %v1091 = vrot.slane %v1083, %v1090
      %v1092 = vsel %vm1052, %v1091, %v1087
      %v1094 = vsel %vm1055, %v1092, 0.0
      %1095 = vadd.xlane.f32.xlu0 %v1094
      %v1096 = vpop.xlane.xlu0 %1095
      %v1097 = vrcp.pop %v1096
      %v1099 = vlaneseq
      %v1100 = vshrl.u32 %v1099, 7
      %v1101 = vsub.s32 0, %v1100
      %v1102 = vrot.slane %v1097, %v1101
      %v1103 = vlaneseq
      %v1104 = vshrl.u32 %v1103, 7
      %v1105 = vsub.s32 1, %v1104
      %v1106 = vrot.slane %v1097, %v1105
      %v1109 = vmul.f32 %v1073, %v1102
      %v1110 = vmul.f32 %v1075, %v1106
      %1112 = vset.pattern.permute.xlu0 0
      %1113 = vperm.xlu0 %1112, %v1109
      %v1114 = vpop.permute.xlu0 %1113
      %1117 = vset.pattern.permute.xlu0 0
      %1118 = vperm.xlu0 %1117, %v1110
      %v1119 = vpop.permute.xlu0 %1118
      %v1121 = vmul.f32 %v1114, %v845
      %v1122 = vmul.f32 %v1119, %v846
      %v1123 = vsel %vm864, %v1121, 0.0
      %v1124 = vrot.slane %v1123, 4
      %v1125 = vadd.f32 %v1123, %v1124
      %v1126 = vrot.slane %v1125, 2
      %v1127 = vadd.f32 %v1125, %v1126
      %v1128 = vrot.slane %v1127, 1
      %v1129 = vadd.f32 %v1127, %v1128
      %v1130 = vsel %vm864, %v1122, 0.0
      %v1131 = vrot.slane %v1130, 4
      %v1132 = vadd.f32 %v1130, %v1131
      %v1133 = vrot.slane %v1132, 2
      %v1134 = vadd.f32 %v1132, %v1133
      %v1135 = vrot.slane %v1134, 1
      %v1136 = vadd.f32 %v1134, %v1135
      %s1137 = smul.u32 %s924, 2
      %s1138 = scalar_lea.vmem [#allocation4], %s1137
      %v1139 = vld [vmem:[%s1138] sm:$0x3]
      %v1140 = vpack.c.bf16 %v1129, %v1129
      %v1141 = vpack.c.bf16 %v1136, %v1136
      %v1144 = vunpack.c.l.b16 %v1140
      %v1145 = vunpack.c.l.b16 %v1141
      %v1146 = vsel %vm1052, %v1145, %v1144
      %v1147 = vpack.c.b16 %v1146, %v1146
      %v1152 = vunpack.c.l.b16 %v914
      %v1153 = vunpack.c.l.b16 %v915
      %v1154 = vunpack.c.l.b16 %v916
      %v1155 = vunpack.c.l.b16 %v917
      %v1156 = vpack.c.b16 %v1153, %v1152
      %v1157 = vpack.c.b16 %v1155, %v1154
      %v1161 = vsel %vm864, %v1147, 0
      %1163 = vmatprep.subr.bf16.mxu0 0
      %1164 = vmatpush1.bf16.msra.mxu0 %v1156
      %1165 = vmatprep.subr.bf16.mxu0 0
      %1166 = vmatpush1.bf16.msra.mxu0 %v1157
      %1167 = vmatprep.subr.bf16.mxu0 0
      %1168 = vmatpush1.bf16.msra.mxu0 0
      %1169 = vmatprep.subr.bf16.mxu0 0
      %1170 = vmatpush1.bf16.msra.mxu0 0
      %1171 = vmatprep.subr.bf16.mxu0 0
      %1172 = vmatpush1.bf16.msra.mxu0 0
      %1173 = vmatprep.subr.bf16.mxu0 0
      %1174 = vmatpush1.bf16.msra.mxu0 0
      %1175 = vmatprep.subr.bf16.mxu0 0
      %1176 = vmatpush1.bf16.msra.mxu0 0
      %1177 = vmatprep.subr.bf16.mxu0 0
      %1178 = vmatpush1.bf16.msra.mxu0 0
      %1179 = vmatprep.subr.bf16.mxu0 0
      %1180 = vmatpush1.bf16.msra.mxu0 0
      %1181 = vmatprep.subr.bf16.mxu0 0
      %1182 = vmatpush1.bf16.msra.mxu0 0
      %1183 = vmatprep.subr.bf16.mxu0 0
      %1184 = vmatpush1.bf16.msra.mxu0 0
      %1185 = vmatprep.subr.bf16.mxu0 0
      %1186 = vmatpush1.bf16.msra.mxu0 0
      %1187 = vmatprep.subr.bf16.mxu0 0
      %1188 = vmatpush1.bf16.msra.mxu0 0
      %1189 = vmatprep.subr.bf16.mxu0 0
      %1190 = vmatpush1.bf16.msra.mxu0 0
      %1191 = vmatprep.subr.bf16.mxu0 0
      %1192 = vmatpush1.bf16.msra.mxu0 0
      %1193 = vmatprep.subr.bf16.mxu0 0
      %1194 = vmatpush1.bf16.msra.mxu0 0
      %1195 = vmatprep.mubr.bf16.mxu0 0
      %1196 = vmatmul.mubr.bf16.gmra.mrb[0].mxu0 %v1161
      %v1197 = vpop.f32.mrb[0].mxu0
      %v1198 = vadd.f32 0.0, %v1197
      %v1199 = vpop.f32.mrb[0].mxu0
      %v1200 = vpop.f32.mrb[0].mxu0
      %v1201 = vpop.f32.mrb[0].mxu0
      %1202 = vdwg.mxu0
      %v1203 = vadd.f32 %v1139, %v1198
      %v1205 = vlaneseq
      %v1206 = vshrl.u32 %v1205, 7
      %v1207 = vsub.s32 0, %v1206
      %v1208 = vrot.slane %v922, %v1207
      %v1214 = vunpack.c.l.b16 %v918
      %v1215 = vunpack.c.l.b16 %v919
      %v1216 = vunpack.c.l.b16 %v920
      %v1217 = vunpack.c.l.b16 %v921
      %v1218 = vpack.c.b16 %v1215, %v1214
      %v1219 = vpack.c.b16 %v1217, %v1216
      %1222 = vmatprep.subr.bf16.mxu0 0
      %1223 = vmatpush1.bf16.msra.mxu0 %v1218
      %1224 = vmatprep.subr.bf16.mxu0 0
      %1225 = vmatpush1.bf16.msra.mxu0 %v1219
      %1226 = vmatprep.subr.bf16.mxu0 0
      %1227 = vmatpush1.bf16.msra.mxu0 0
      %1228 = vmatprep.subr.bf16.mxu0 0
      %1229 = vmatpush1.bf16.msra.mxu0 0
      %1230 = vmatprep.subr.bf16.mxu0 0
      %1231 = vmatpush1.bf16.msra.mxu0 0
      %1232 = vmatprep.subr.bf16.mxu0 0
      %1233 = vmatpush1.bf16.msra.mxu0 0
      %1234 = vmatprep.subr.bf16.mxu0 0
      %1235 = vmatpush1.bf16.msra.mxu0 0
      %1236 = vmatprep.subr.bf16.mxu0 0
      %1237 = vmatpush1.bf16.msra.mxu0 0
      %1238 = vmatprep.subr.bf16.mxu0 0
      %1239 = vmatpush1.bf16.msra.mxu0 0
      %1240 = vmatprep.subr.bf16.mxu0 0
      %1241 = vmatpush1.bf16.msra.mxu0 0
      %1242 = vmatprep.subr.bf16.mxu0 0
      %1243 = vmatpush1.bf16.msra.mxu0 0
      %1244 = vmatprep.subr.bf16.mxu0 0
      %1245 = vmatpush1.bf16.msra.mxu0 0
      %1246 = vmatprep.subr.bf16.mxu0 0
      %1247 = vmatpush1.bf16.msra.mxu0 0
      %1248 = vmatprep.subr.bf16.mxu0 0
      %1249 = vmatpush1.bf16.msra.mxu0 0
      %1250 = vmatprep.subr.bf16.mxu0 0
      %1251 = vmatpush1.bf16.msra.mxu0 0
      %1252 = vmatprep.subr.bf16.mxu0 0
      %1253 = vmatpush1.bf16.msra.mxu0 0
      %1254 = vmatprep.mubr.bf16.mxu0 0
      %1255 = vmatmul.mubr.bf16.gmra.mrb[0].mxu0 %v947
      %v1256 = vpop.f32.mrb[0].mxu0
      %v1257 = vadd.f32 %v1208, %v1256
      %v1258 = vpop.f32.mrb[0].mxu0
      %v1259 = vpop.f32.mrb[0].mxu0
      %v1260 = vpop.f32.mrb[0].mxu0
      %1261 = vdwg.mxu0
      %v1262 = vadd.f32 %v1203, %v1257
      %v1263 = vxor.u32 %v1262, 2147483648
      %v1264 = vmul.f32 %v1263, 1.442695
      %v1265 = vpow.pop %v1264
      %v1266 = vadd.f32 %v1265, 1.0
      %v1267 = vrcp.pop %v1266
      %v1268 = vmul.f32 1.0, %v1267
      %1270 = vrot.lane.b32.xlu0 %v1257, 64
      %v1271 = vpop.permute.xlu0 %1270
      %v1273 = vmul.f32 %v1268, %v1271
      %1275 = vrot.lane.b32.xlu0 %v1273, 64
      %v1276 = vpop.permute.xlu0 %1275
      %v1278 = vadd.f32 %v1203, %v1276
      %v1279 = vtanh.pop %v1278
      %v1280 = vsub.f32 1.0, %v1268
      %1282 = vrot.lane.b32.xlu0 %v1279, 96
      %v1283 = vpop.permute.xlu0 %1282
      %v1285 = vmul.f32 %v1280, %v1283
      %v1286 = vmul.f32 %v1268, %v929
      %v1287 = vadd.f32 %v1285, %v1286
      %v1288 = vlaneseq
      %v1289 = vshrl.u32 %v1288, 7
      %v1290 = vsub.s32 %v1043, %v1289
      %v1291 = vrot.slane %v1114, %v1290
      %v1292 = vlaneseq
      %v1293 = vshrl.u32 %v1292, 7
      %v1294 = vsub.s32 %v1043, %v1293
      %v1295 = vrot.slane %v1119, %v1294
      %v1296 = vsel %vm1052, %v1295, %v1291
      %s1298 = scalar_lea.vmem [#allocation40], %s1137
      %1299 = vst.msk [vmem:[%s1298] sm:$0x3] %vm1055, %v1296
      %v1302 = vsel %vm1052, %v1136, %v1129
      %s1304 = scalar_lea.vmem [#allocation6], %s1137
      %vm1305 = vcmask 254976
      %1306 = vst.msk [vmem:[%s1304] sm:$0x3] %vm1305, %v1302
      %1308 = vrot.lane.b32.xlu0 %v1287, 96
      %v1309 = vpop.permute.xlu0 %1308
      %s1311 = scalar_lea.vmem [#allocation5], %s1137
      %1312 = vst.msk [vmem:[%s1311] sm:$0x3] %vm1305, %v1309
    $region173: #{tpu_custom_call.1} parent=1 // loop_footer
      %s928 = sadd.s32 1, %s924
    $region174: #{tpu_custom_call.1} parent=1 // loop_footer_branch
      %923 = sbr.rel target = $region170
    $region175: #{tpu_custom_call.1} parent=1 // loop_exit
      _
    %v1313 = vld [vmem:[#allocation5] sm:$0x3]
    %v1314 = vld [vmem:[#allocation5 + $0x2] sm:$0x3]
    %v1315 = vld [vmem:[#allocation5 + $0x4] sm:$0x3]
    %v1316 = vld [vmem:[#allocation5 + $0x6] sm:$0x3]
    %v1317 = vld [vmem:[#allocation5 + $0x8] sm:$0x3]
    %v1318 = vld [vmem:[#allocation6] sm:$0x3]
    %v1319 = vld [vmem:[#allocation6 + $0x2] sm:$0x3]
    %v1320 = vld [vmem:[#allocation6 + $0x4] sm:$0x3]
    %v1321 = vld [vmem:[#allocation6 + $0x6] sm:$0x3]
    %v1322 = vld [vmem:[#allocation6 + $0x8] sm:$0x3]
    %v1323 = vld [vmem:[#allocation33] sm:$0xf]
    %v1324 = vld [vmem:[#allocation33 + $0x4] sm:$0xf]
    %v1325 = vld [vmem:[#allocation33 + $0x8] sm:$0xf]
    %v1326 = vld [vmem:[#allocation33 + $0xc] sm:$0xf]
    %v1332 = vcombine.low %v1313, %v1314
    %v1333 = vcombine.low %v1315, %v1316
    %v1335 = vunpack.c.l.s4 1983009808
    %v1336 = vunpack.c.0.s8 %v1335
    %v1337 = vlaneseq
    %v1338 = vshrl.u32 %v1337, 7
    %v1339 = vsub.s32 %v1336, %v1338
    %v1340 = vrot.slane %v1332, %v1339
    %v1342 = vunpack.c.l.s4 1983009808
    %v1343 = vunpack.c.0.s8 %v1342
    %v1344 = vlaneseq
    %v1345 = vshrl.u32 %v1344, 7
    %v1346 = vsub.s32 %v1343, %v1345
    %v1347 = vrot.slane %v1333, %v1346
    %v1348 = vcombine.low %v1340, %v1347
    %v1350 = vunpack.c.l.s4 1983009808
    %v1351 = vunpack.c.0.s8 %v1350
    %v1352 = vlaneseq
    %v1353 = vshrl.u32 %v1352, 7
    %v1354 = vsub.s32 %v1351, %v1353
    %v1355 = vrot.slane %v1317, %v1354
    %v1358 = vpack.c.bf16 %v1355, %v1348
    %v1359 = vld [vmem:[#allocation34] sm:$0xf]
    %v1360 = vld [vmem:[#allocation34 + $0x4] sm:$0xf]
    %v1361 = vld [vmem:[#allocation34 + $0x8] sm:$0xf]
    %v1362 = vld [vmem:[#allocation34 + $0xc] sm:$0xf]
    %v1368 = vcombine.low %v1318, %v1319
    %v1369 = vcombine.low %v1320, %v1321
    %v1371 = vunpack.c.l.s4 1983009808
    %v1372 = vunpack.c.0.s8 %v1371
    %v1373 = vlaneseq
    %v1374 = vshrl.u32 %v1373, 7
    %v1375 = vsub.s32 %v1372, %v1374
    %v1376 = vrot.slane %v1368, %v1375
    %v1378 = vunpack.c.l.s4 1983009808
    %v1379 = vunpack.c.0.s8 %v1378
    %v1380 = vlaneseq
    %v1381 = vshrl.u32 %v1380, 7
    %v1382 = vsub.s32 %v1379, %v1381
    %v1383 = vrot.slane %v1369, %v1382
    %v1384 = vcombine.low %v1376, %v1383
    %v1386 = vunpack.c.l.s4 1983009808
    %v1387 = vunpack.c.0.s8 %v1386
    %v1388 = vlaneseq
    %v1389 = vshrl.u32 %v1388, 7
    %v1390 = vsub.s32 %v1387, %v1389
    %v1391 = vrot.slane %v1322, %v1390
    %v1394 = vpack.c.bf16 %v1391, %v1384
    %v1399 = vunpack.c.l.b16 %v1359
    %v1400 = vunpack.c.l.b16 %v1360
    %v1401 = vunpack.c.l.b16 %v1361
    %v1402 = vunpack.c.l.b16 %v1362
    %v1403 = vpack.c.b16 %v1400, %v1399
    %v1404 = vpack.c.b16 %v1402, %v1401
    %v1408 = vsel %vm864, %v1394, 0
    %1410 = vmatprep.subr.bf16.mxu0 0
    %1411 = vmatpush1.bf16.msra.mxu0 %v1403
    %1412 = vmatprep.subr.bf16.mxu0 0
    %1413 = vmatpush1.bf16.msra.mxu0 %v1404
    %1414 = vmatprep.subr.bf16.mxu0 0
    %1415 = vmatpush1.bf16.msra.mxu0 0
    %1416 = vmatprep.subr.bf16.mxu0 0
    %1417 = vmatpush1.bf16.msra.mxu0 0
    %1418 = vmatprep.subr.bf16.mxu0 0
    %1419 = vmatpush1.bf16.msra.mxu0 0
    %1420 = vmatprep.subr.bf16.mxu0 0
    %1421 = vmatpush1.bf16.msra.mxu0 0
    %1422 = vmatprep.subr.bf16.mxu0 0
    %1423 = vmatpush1.bf16.msra.mxu0 0
    %1424 = vmatprep.subr.bf16.mxu0 0
    %1425 = vmatpush1.bf16.msra.mxu0 0
    %1426 = vmatprep.subr.bf16.mxu0 0
    %1427 = vmatpush1.bf16.msra.mxu0 0
    %1428 = vmatprep.subr.bf16.mxu0 0
    %1429 = vmatpush1.bf16.msra.mxu0 0
    %1430 = vmatprep.subr.bf16.mxu0 0
    %1431 = vmatpush1.bf16.msra.mxu0 0
    %1432 = vmatprep.subr.bf16.mxu0 0
    %1433 = vmatpush1.bf16.msra.mxu0 0
    %1434 = vmatprep.subr.bf16.mxu0 0
    %1435 = vmatpush1.bf16.msra.mxu0 0
    %1436 = vmatprep.subr.bf16.mxu0 0
    %1437 = vmatpush1.bf16.msra.mxu0 0
    %1438 = vmatprep.subr.bf16.mxu0 0
    %1439 = vmatpush1.bf16.msra.mxu0 0
    %1440 = vmatprep.subr.bf16.mxu0 0
    %1441 = vmatpush1.bf16.msra.mxu0 0
    %1442 = vmatprep.mubr.bf16.mxu0 0
    %1443 = vmatmul.mubr.bf16.gmra.mrb[0].mxu0 %v1408
    %v1444 = vpop.f32.mrb[0].mxu0
    %v1445 = vadd.f32 0.0, %v1444
    %v1446 = vpop.f32.mrb[0].mxu0
    %v1447 = vpop.f32.mrb[0].mxu0
    %v1448 = vadd.f32 0.0, %v1447
    %v1449 = vpop.f32.mrb[0].mxu0
    %1450 = vdwg.mxu0
    %v1455 = vunpack.c.l.b16 %v1323
    %v1456 = vunpack.c.l.b16 %v1324
    %v1457 = vunpack.c.l.b16 %v1325
    %v1458 = vunpack.c.l.b16 %v1326
    %v1459 = vpack.c.b16 %v1456, %v1455
    %v1460 = vpack.c.b16 %v1458, %v1457
    %v1464 = vsel %vm864, %v1358, 0
    %1466 = vmatprep.subr.bf16.mxu0 0
    %1467 = vmatpush1.bf16.msra.mxu0 %v1459
    %1468 = vmatprep.subr.bf16.mxu0 0
    %1469 = vmatpush1.bf16.msra.mxu0 %v1460
    %1470 = vmatprep.subr.bf16.mxu0 0
    %1471 = vmatpush1.bf16.msra.mxu0 0
    %1472 = vmatprep.subr.bf16.mxu0 0
    %1473 = vmatpush1.bf16.msra.mxu0 0
    %1474 = vmatprep.subr.bf16.mxu0 0
    %1475 = vmatpush1.bf16.msra.mxu0 0
    %1476 = vmatprep.subr.bf16.mxu0 0
    %1477 = vmatpush1.bf16.msra.mxu0 0
    %1478 = vmatprep.subr.bf16.mxu0 0
    %1479 = vmatpush1.bf16.msra.mxu0 0
    %1480 = vmatprep.subr.bf16.mxu0 0
    %1481 = vmatpush1.bf16.msra.mxu0 0
    %1482 = vmatprep.subr.bf16.mxu0 0
    %1483 = vmatpush1.bf16.msra.mxu0 0
    %1484 = vmatprep.subr.bf16.mxu0 0
    %1485 = vmatpush1.bf16.msra.mxu0 0
    %1486 = vmatprep.subr.bf16.mxu0 0
    %1487 = vmatpush1.bf16.msra.mxu0 0
    %1488 = vmatprep.subr.bf16.mxu0 0
    %1489 = vmatpush1.bf16.msra.mxu0 0
    %1490 = vmatprep.subr.bf16.mxu0 0
    %1491 = vmatpush1.bf16.msra.mxu0 0
    %1492 = vmatprep.subr.bf16.mxu0 0
    %1493 = vmatpush1.bf16.msra.mxu0 0
    %1494 = vmatprep.subr.bf16.mxu0 0
    %1495 = vmatpush1.bf16.msra.mxu0 0
    %1496 = vmatprep.subr.bf16.mxu0 0
    %1497 = vmatpush1.bf16.msra.mxu0 0
    %1498 = vmatprep.mubr.bf16.mxu0 0
    %1499 = vmatmul.mubr.bf16.gmra.mrb[0].mxu0 %v1464
    %v1500 = vpop.f32.mrb[0].mxu0
    %v1501 = vadd.f32 %v1445, %v1500
    %v1502 = vpop.f32.mrb[0].mxu0
    %v1503 = vpop.f32.mrb[0].mxu0
    %v1504 = vadd.f32 %v1448, %v1503
    %v1505 = vpop.f32.mrb[0].mxu0
    %1506 = vdwg.mxu0
    %v1507 = vld [vmem:[#allocation36] sm:$0xf]
    %v1508 = vld [vmem:[#allocation36 + $0x4] sm:$0xf]
    %v1511 = vunpack.c.l.b16 %v1507
    %v1512 = vunpack.c.l.b16 %v1508
    %v1513 = vpack.c.b16 %v1512, %v1511
    %1515 = vmatprep.subr.bf16.mxu0 0
    %1516 = vmatpush1.bf16.msra.mxu0 %v1513
    %1517 = vmatprep.subr.bf16.mxu0 0
    %1518 = vmatpush1.bf16.msra.mxu0 0
    %1519 = vmatprep.subr.bf16.mxu0 0
    %1520 = vmatpush1.bf16.msra.mxu0 0
    %1521 = vmatprep.subr.bf16.mxu0 0
    %1522 = vmatpush1.bf16.msra.mxu0 0
    %1523 = vmatprep.subr.bf16.mxu0 0
    %1524 = vmatpush1.bf16.msra.mxu0 0
    %1525 = vmatprep.subr.bf16.mxu0 0
    %1526 = vmatpush1.bf16.msra.mxu0 0
    %1527 = vmatprep.subr.bf16.mxu0 0
    %1528 = vmatpush1.bf16.msra.mxu0 0
    %1529 = vmatprep.subr.bf16.mxu0 0
    %1530 = vmatpush1.bf16.msra.mxu0 0
    %1531 = vmatprep.subr.bf16.mxu0 0
    %1532 = vmatpush1.bf16.msra.mxu0 0
    %1533 = vmatprep.subr.bf16.mxu0 0
    %1534 = vmatpush1.bf16.msra.mxu0 0
    %1535 = vmatprep.subr.bf16.mxu0 0
    %1536 = vmatpush1.bf16.msra.mxu0 0
    %1537 = vmatprep.subr.bf16.mxu0 0
    %1538 = vmatpush1.bf16.msra.mxu0 0
    %1539 = vmatprep.subr.bf16.mxu0 0
    %1540 = vmatpush1.bf16.msra.mxu0 0
    %1541 = vmatprep.subr.bf16.mxu0 0
    %1542 = vmatpush1.bf16.msra.mxu0 0
    %1543 = vmatprep.subr.bf16.mxu0 0
    %1544 = vmatpush1.bf16.msra.mxu0 0
    %1545 = vmatprep.subr.bf16.mxu0 0
    %1546 = vmatpush1.bf16.msra.mxu0 0
    %1547 = vmatprep.mubr.bf16.mxu0 0
    %1548 = vmatmul.mubr.bf16.gmra.mrb[0].mxu0 %v596
    %v1549 = vpop.f32.mrb[0].mxu0
    %v1550 = vadd.f32 0.0, %v1549
    %v1551 = vpop.f32.mrb[0].mxu0
    %v1552 = vpop.f32.mrb[0].mxu0
    %v1553 = vadd.f32 0.0, %v1552
    %v1554 = vpop.f32.mrb[0].mxu0
    %1555 = vdwg.mxu0
    %v1556 = vadd.f32 %v1501, %v1550
    %v1557 = vadd.f32 %v1504, %v1553
    %v1558 = vld [vmem:[#allocation37] sm:$0x1]
    %v1560 = vlaneseq
    %v1561 = vshrl.u32 %v1560, 7
    %v1562 = vsub.s32 0, %v1561
    %v1563 = vrot.slane %v1558, %v1562
    %v1565 = vadd.f32 %v1556, %v1563
    %v1566 = vadd.f32 %v1557, %v1563
    %1567 = vst.msk [vmem:[#allocation39] sm:$0xff] %vm530, %v1565
    %vm1568 = vcmask 189440
    %1569 = vst.msk [vmem:[#allocation39 + $0x8] sm:$0x3] %vm1568, %v1566
    // Predicated region
    $region176: #{tpu_custom_call.1} parent=1 // pred_check
      _
    $region177: #{tpu_custom_call.1} parent=1 // pred_check_branch
      %1571 = sbr.rel (0) target = $region179
    $region178: #{tpu_custom_call.1} parent=1 // pred_region
      %s1573 = ssub.s32 256, 256
      %1574 = vsyncadd [#allocation9], %s1573
      %s1575 = sshll.u32 [#allocation39], 4
      %s1576 = int_to_ptr.vmem [resolvable:$true] %s1575
      %1581 = dma.vmem_to_hbm [thread:$0]  %s1576, 256, %s20, [#allocation9], 128, 128, 8
    $region179: #{tpu_custom_call.1} parent=1 // pred_fallthru
      _
    // Predicated region
    $region180: #{tpu_custom_call.1} parent=1 // pred_check
      _
    $region181: #{tpu_custom_call.1} parent=1 // pred_check_branch
      %1583 = sbr.rel (0) target = $region183
    $region182: #{tpu_custom_call.1} parent=1 // pred_region
      %s1585 = ssub.s32 160, 160
      %1586 = vsyncadd [#allocation41], %s1585
      %s1587 = sshll.u32 [#allocation40], 4
      %s1588 = int_to_ptr.vmem [resolvable:$true] %s1587
      %1593 = dma.vmem_to_hbm [thread:$0]  %s1588, 160, %s21, [#allocation41], 32, 32, 2
    $region183: #{tpu_custom_call.1} parent=1 // pred_fallthru
      _
    // Predicated region
    $region184: #{tpu_custom_call.1} parent=1 // pred_check
      _
    $region185: #{tpu_custom_call.1} parent=1 // pred_check_branch
      %1595 = sbr.rel (0) target = $region187
    $region186: #{tpu_custom_call.1} parent=1 // pred_region
      %1596 = dma.done [#allocation9], 256
    $region187: #{tpu_custom_call.1} parent=1 // pred_fallthru
      _
    // Predicated region
    $region188: #{tpu_custom_call.1} parent=1 // pred_check
      _
    $region189: #{tpu_custom_call.1} parent=1 // pred_check_branch
      %1598 = sbr.rel (0) target = $region191
    $region190: #{tpu_custom_call.1} parent=1 // pred_region
      %1599 = dma.done [#allocation41], 160
    $region191: #{tpu_custom_call.1} parent=1 // pred_fallthru
      _
    %1600 = vsyncpa [#allocation8], 1
    %1601 = vsyncpa [#allocation11], 1
    %1602 = vsyncpa [#allocation14], 1
    %1603 = vsyncpa [#allocation17], 1
    %1604 = vsyncpa [#allocation20], 1
    %1605 = vsyncpa [#allocation23], 1
    %1606 = vsyncpa [#allocation26], 1
    %1607 = vsyncpa [#allocation29], 1
    %1608 = vsyncpa [#allocation32], 1
    %1609 = vsyncpa [#allocation35], 1
    %1610 = vsyncpa [#allocation38], 1
    %1611 = vsyncpa [#allocation9], 1
    %1612 = vsyncpa [#allocation41], 1

</llo_original>
